<compile_context>
chip_gen: v7x
topology: tpu7x:2x2x1
jax: 0.10.0
libtpu: 0.0.40
codegen_flags: <defaults>
</compile_context>

<pallas_src>
import functools

import jax
import jax.numpy as jnp
from jax.experimental import pallas as pl
from jax.experimental.pallas import tpu as pltpu

MINUS_INF = -1e8                # matches self.minus_inf in the PyTorch module
VMEM_LIMIT = 64 * 1024 * 1024   # explicit scoped-VMEM cap (safe on v5e/v6e/v7x)


def _round_up(x, m):
    return (x + m - 1) // m * m


# ----------------------------- Pallas kernels ------------------------------

def _proj_elu_kernel(x_ref, w_ref, b_ref, o_ref):
    # x: (TM, H) bf16 ; w: (H, Dtot) bf16 ; b: (1, Dtot) f32 ; o: (TM, Dtot) f32
    y = jnp.dot(x_ref[...], w_ref[...], preferred_element_type=jnp.float32) + b_ref[...]
    # ELU(alpha=1); clamp the exp argument so the unused branch never overflows.
    o_ref[...] = jnp.where(y > 0, y, jnp.exp(jnp.minimum(y, 0.0)) - 1.0)


def fused_linear_elu(x2d, w, b, *, tm=256):
    """ELU(x2d @ w + b) for x2d:[M,H], w:[H,Dtot]; tiled over rows on the MXU."""
    M, H = x2d.shape
    Dtot = w.shape[1]
    if M < tm:
        tm = _round_up(M, 8)
    Mp = _round_up(M, tm)
    if Mp != M:
        x2d = jnp.pad(x2d, ((0, Mp - M), (0, 0)))
    out = pl.pallas_call(
        _proj_elu_kernel,
        out_shape=jax.ShapeDtypeStruct((Mp, Dtot), jnp.float32),
        grid_spec=pltpu.PrefetchScalarGridSpec(
            num_scalar_prefetch=0,
            grid=(Mp // tm,),
            in_specs=[pl.BlockSpec((tm, H), lambda i: (i, 0)),
                      pl.BlockSpec((H, Dtot), lambda i: (0, 0)),
                      pl.BlockSpec((1, Dtot), lambda i: (0, 0))],
            out_specs=pl.BlockSpec((tm, Dtot), lambda i: (i, 0))),
        compiler_params=pltpu.CompilerParams(
            dimension_semantics=("parallel",),
            vmem_limit_bytes=VMEM_LIMIT),
    )(x2d.astype(jnp.bfloat16), w.astype(jnp.bfloat16), b.astype(jnp.float32))
    return out[:M]


def _biaffine_kernel(h_ref, mT_ref, u_ref, o_ref):
    # scores = (h_aug @ U_aug) @ m_aug^T ; W_d/W_e/bias are folded into U_aug.
    hU = jnp.dot(h_ref[0], u_ref[...], preferred_element_type=jnp.float32)     # [Lp, Da]
    o_ref[0] = jnp.dot(hU.astype(jnp.bfloat16), mT_ref[0],
                       preferred_element_type=jnp.float32)                      # [Lp, Lp]


def biaffine_scores(h_aug, mT_aug, u_aug):
    B, Lp, Da = h_aug.shape
    return pl.pallas_call(
        _biaffine_kernel,
        out_shape=jax.ShapeDtypeStruct((B, Lp, Lp), jnp.float32),
        grid_spec=pltpu.PrefetchScalarGridSpec(
            num_scalar_prefetch=0,
            grid=(B,),
            in_specs=[pl.BlockSpec((1, Lp, Da), lambda i: (i, 0, 0)),
                      pl.BlockSpec((1, Da, Lp), lambda i: (i, 0, 0)),
                      pl.BlockSpec((Da, Da), lambda i: (0, 0))],
            out_specs=pl.BlockSpec((1, Lp, Lp), lambda i: (i, 0, 0))),
        compiler_params=pltpu.CompilerParams(
            dimension_semantics=("parallel",),
            vmem_limit_bytes=VMEM_LIMIT),
    )(h_aug, mT_aug, u_aug)


def _bilinear_kernel(h_ref, m_ref, u_ref, g_ref, wl_ref, wr_ref, b_ref, o_ref, *,
                     num_labels):
    h = h_ref[...]                                     # (TM, DLp) bf16
    m = m_ref[...]                                     # (TM, DLp) bf16
    # one wide MXU matmul: hU[t, o*DLp + j] = sum_i h[t,i] U[o,i,j]
    hU = jnp.dot(h, u_ref[...], preferred_element_type=jnp.float32)            # (TM, NL*DLp)
    # lane-replicate m (128-aligned stripes), then reduce each label group with a
    # 0/1 matmul: bil[t,o] = sum_j hU[t, o*DLp + j] * m[t, j]
    m_rep = jnp.concatenate([m.astype(jnp.float32)] * num_labels, axis=-1)      # (TM, NL*DLp)
    bil = jnp.dot(hU * m_rep, g_ref[...], preferred_element_type=jnp.float32)   # (TM, NL)
    lin = (jnp.dot(h, wl_ref[...], preferred_element_type=jnp.float32)
           + jnp.dot(m, wr_ref[...], preferred_element_type=jnp.float32))       # (TM, NL)
    o_ref[...] = bil + lin + b_ref[...]


def bilinear_scores(h2d, m2d, U, w_l, w_r, b, *, tm=128):
    """h2d,m2d:[M,DL]; U:[NL,DL,DL]; w_l/w_r:[NL,DL]; b:[1,NL]  ->  [M,NL]."""
    M, DL = h2d.shape
    NL = U.shape[0]
    DLp = _round_up(DL, 128)                      # lane-dense per-label stripe
    # pack weights (hoisted / fused by XLA under jit; done once per forward)
    Up = jnp.zeros((NL, DLp, DLp), jnp.float32).at[:, :DL, :DL].set(U)
    u2d = jnp.transpose(Up, (1, 0, 2)).reshape(DLp, NL * DLp).astype(jnp.bfloat16)
    g = jnp.repeat(jnp.eye(NL, dtype=jnp.float32), DLp, axis=0)                 # (NL*DLp, NL)
    wlT = jnp.zeros((DLp, NL), jnp.float32).at[:DL, :].set(w_l.T).astype(jnp.bfloat16)
    wrT = jnp.zeros((DLp, NL), jnp.float32).at[:DL, :].set(w_r.T).astype(jnp.bfloat16)
    if M < tm:
        tm = _round_up(M, 8)
    Mp = _round_up(M, tm)
    hp = jnp.zeros((Mp, DLp), jnp.bfloat16).at[:M, :DL].set(h2d.astype(jnp.bfloat16))
    mp = jnp.zeros((Mp, DLp), jnp.bfloat16).at[:M, :DL].set(m2d.astype(jnp.bfloat16))
    kernel = functools.partial(_bilinear_kernel, num_labels=NL)
    out = pl.pallas_call(
        kernel,
        out_shape=jax.ShapeDtypeStruct((Mp, NL), jnp.float32),
        grid_spec=pltpu.PrefetchScalarGridSpec(
            num_scalar_prefetch=0,
            grid=(Mp // tm,),
            in_specs=[pl.BlockSpec((tm, DLp), lambda i: (i, 0)),
                      pl.BlockSpec((tm, DLp), lambda i: (i, 0)),
                      pl.BlockSpec((DLp, NL * DLp), lambda i: (0, 0)),
                      pl.BlockSpec((NL * DLp, NL), lambda i: (0, 0)),
                      pl.BlockSpec((DLp, NL), lambda i: (0, 0)),
                      pl.BlockSpec((DLp, NL), lambda i: (0, 0)),
                      pl.BlockSpec((1, NL), lambda i: (0, 0))],
            out_specs=pl.BlockSpec((tm, NL), lambda i: (i, 0))),
        compiler_params=pltpu.CompilerParams(
            dimension_semantics=("parallel",),
            vmem_limit_bytes=VMEM_LIMIT),
    )(hp, mp, u2d, g, wlT, wrT, b.astype(jnp.float32))
    return out[:M]


# ------------------------------ parameters ---------------------------------

def init_params(key, input_size, edge_node_hidden, edge_label_hidden, num_labels):
    ks = jax.random.split(key, 16)

    def lin(k, din, dout):
        k1, k2 = jax.random.split(k)
        return (jax.random.normal(k1, (din, dout), jnp.float32) * 0.1,
                jax.random.normal(k2, (1, dout), jnp.float32) * 0.1)

    p = {}
    p['head_sentinel'] = jax.random.normal(ks[0], (1, 1, input_size), jnp.float32)
    p['Wnh'], p['bnh'] = lin(ks[1], input_size, edge_node_hidden)
    p['Wnm'], p['bnm'] = lin(ks[2], input_size, edge_node_hidden)
    p['Wlh'], p['blh'] = lin(ks[3], input_size, edge_label_hidden)
    p['Wlm'], p['blm'] = lin(ks[4], input_size, edge_label_hidden)
    # BiaffineAttention (num_labels=1, squeezed)
    p['bi_U'] = jax.random.normal(ks[5], (edge_node_hidden, edge_node_hidden), jnp.float32) * 0.1
    p['bi_Wd'] = jax.random.normal(ks[6], (1, edge_node_hidden), jnp.float32) * 0.1
    p['bi_We'] = jax.random.normal(ks[7], (1, edge_node_hidden), jnp.float32) * 0.1
    p['bi_b'] = jax.random.normal(ks[8], (1, 1), jnp.float32) * 0.1
    # BiLinear edge-label scorer
    p['bl_U'] = jax.random.normal(ks[9], (num_labels, edge_label_hidden, edge_label_hidden),
                                  jnp.float32) * 0.1
    p['bl_Wl'] = jax.random.normal(ks[10], (num_labels, edge_label_hidden), jnp.float32) * 0.1
    p['bl_Wr'] = jax.random.normal(ks[11], (num_labels, edge_label_hidden), jnp.float32) * 0.1
    p['bl_b'] = jax.random.normal(ks[12], (1, num_labels), jnp.float32) * 0.1
    return p


# ------------------------------- forward -----------------------------------

def deep_biaffine_forward(params, memory_bank, edge_heads, edge_labels, corefs, mask):
    B, L, H = memory_bank.shape
    num_nodes = mask.sum().astype(jnp.float32)          # computed before sentinel, like torch

    # _add_head_sentinel
    sentinel = jnp.broadcast_to(params['head_sentinel'], (B, 1, H))
    memory_bank = jnp.concatenate([sentinel, memory_bank], axis=1)
    edge_heads = jnp.concatenate([jnp.zeros((B, 1), edge_heads.dtype), edge_heads], axis=1)
    edge_labels = jnp.concatenate([jnp.zeros((B, 1), edge_labels.dtype), edge_labels], axis=1)
    corefs = jnp.concatenate([jnp.zeros((B, 1), corefs.dtype), corefs], axis=1)
    mask = jnp.concatenate([jnp.ones((B, 1), mask.dtype), mask], axis=1)
    Lp = L + 1
    maskf = mask.astype(jnp.float32)

    # encode: all four Linear+ELU projections in ONE row-tiled pallas_call
    # (Dropout2d is identity in eval mode; transpose/chunk are no-ops)
    DN = params['Wnh'].shape[1]
    DL = params['Wlh'].shape[1]
    W_all = jnp.concatenate([params['Wnh'], params['Wnm'], params['Wlh'], params['Wlm']], axis=1)
    b_all = jnp.concatenate([params['bnh'], params['bnm'], params['blh'], params['blm']], axis=1)
    proj = fused_linear_elu(memory_bank.reshape(B * Lp, H), W_all, b_all)
    proj = proj.reshape(B, Lp, 2 * DN + 2 * DL)
    edge_node_h = proj[..., :DN]
    edge_node_m = proj[..., DN:2 * DN]
    edge_label_h = proj[..., 2 * DN:2 * DN + DL]
    edge_label_m = proj[..., 2 * DN + DL:]

    # edge-node scores [B, Lp(head), Lp(modifier)]: fold W_d/W_e/bias into U_aug
    Da = _round_up(DN + 1, 8)
    U_aug = jnp.zeros((Da, Da), jnp.float32)
    U_aug = U_aug.at[:DN, :DN].set(params['bi_U'])
    U_aug = U_aug.at[:DN, DN].set(params['bi_Wd'][0])
    U_aug = U_aug.at[DN, :DN].set(params['bi_We'][0])
    U_aug = U_aug.at[DN, DN].set(params['bi_b'][0, 0])
    ones = jnp.ones((B, Lp, 1), jnp.float32)
    zpad = jnp.zeros((B, Lp, Da - DN - 1), jnp.float32)
    h_aug = jnp.concatenate([edge_node_h, ones, zpad], axis=-1).astype(jnp.bfloat16)
    mT_aug = jnp.swapaxes(jnp.concatenate([edge_node_m, ones, zpad], axis=-1),
                          1, 2).astype(jnp.bfloat16)
    raw_scores = biaffine_scores(h_aug, mT_aug, U_aug.astype(jnp.bfloat16))
    edge_node_scores = raw_scores * maskf[:, :, None] * maskf[:, None, :]

    # ---------------------------- get_loss (node part) ----------------------
    mask_sum = maskf[:, :, None] + maskf[:, None, :]    # mask.unsqueeze(2) + mask.unsqueeze(1)
    edge_node_ll = jax.nn.log_softmax(edge_node_scores + jnp.log(mask_sum + 1e-45), axis=1)

    # -------------------------- greedy decode (heads) -----------------------
    dec_scores = edge_node_scores + jnp.diag(jnp.full((Lp,), -jnp.inf, jnp.float32))
    minus_mask = (1.0 - maskf) * MINUS_INF
    dec_scores = dec_scores + minus_mask[:, :, None] + minus_mask[:, None, :]
    pred_heads = jnp.argmax(dec_scores, axis=1).astype(edge_heads.dtype)

    # ---------- edge-label scores: gold + predicted heads in ONE call -------
    bidx = jnp.arange(B)[:, None]
    midx = jnp.broadcast_to(jnp.arange(Lp)[None, :], (B, Lp))
    label_h_gold = edge_label_h[bidx, edge_heads]       # [B, Lp, DL]
    label_h_pred = edge_label_h[bidx, pred_heads]       # [B, Lp, DL]
    h_all = jnp.concatenate([label_h_gold, label_h_pred], axis=0).reshape(2 * B * Lp, DL)
    m_all = jnp.concatenate([edge_label_m, edge_label_m], axis=0).reshape(2 * B * Lp, DL)
    scores_all = bilinear_scores(h_all, m_all, params['bl_U'], params['bl_Wl'],
                                 params['bl_Wr'], params['bl_b'])
    scores_all = scores_all.reshape(2, B, Lp, -1)
    edge_label_scores = scores_all[0]                   # gold-head label scores
    pred_label_scores = scores_all[1]                   # greedy-head label scores

    edge_label_ll = jax.nn.log_softmax(edge_label_scores, axis=2)
    gold_node_ll = edge_node_ll[bidx, edge_heads, midx]
    gold_label_ll = edge_label_ll[bidx, midx, edge_labels]
    edge_node_nll = -jnp.sum(gold_node_ll[:, 1:])
    edge_label_nll = -jnp.sum(gold_label_ll[:, 1:])

    pred_labels = jnp.argmax(pred_label_scores, axis=2).astype(edge_labels.dtype)

    # TODO(synk): AttachmentScores metric update and MST decoding (decode_mst /
    # decode_mst_with_coreference) are stateful / CPU graph algorithms with no
    # Pallas equivalent; greedy decoding is used (corefs is therefore unused).

    total_loss = edge_node_nll + edge_label_nll
    return dict(edge_heads=pred_heads[:, 1:],
                edge_labels=pred_labels[:, 1:],
                loss=total_loss / num_nodes,
                total_loss=total_loss,
                num_nodes=num_nodes)


# --------------------------------- main -------------------------------------

if __name__ == "__main__":
    B, L, H = 2, 8, 32           # batch, seq, input_size
    DN, DL, NL = 16, 16, 8       # edge_node_hidden, edge_label_hidden, num_labels

    key = jax.random.PRNGKey(0)
    kp, kx, kh, kl = jax.random.split(key, 4)
    params = init_params(kp, H, DN, DL, NL)

    memory_bank = jax.random.normal(kx, (B, L, H), jnp.float32)
    edge_heads = jax.random.randint(kh, (B, L), 0, L + 1, jnp.int32)
    edge_labels = jax.random.randint(kl, (B, L), 0, NL, jnp.int32)
    corefs = jnp.zeros((B, L), jnp.int32)
    mask = jnp.array([[1] * L, [1] * (L - 2) + [0, 0]], jnp.int32)

    fwd = jax.jit(deep_biaffine_forward)
    out = fwd(params, memory_bank, edge_heads, edge_labels, corefs, mask)
    out = jax.tree_util.tree_map(jax.block_until_ready, out)
    print("KERNEL_OK")
</pallas_src>

<mosaic_0001>
module attributes {stable_mosaic.version = 11 : i64} {
  func.func @_proj_elu_kernel(%arg0: i32, %arg1: memref<24x32xbf16, #tpu.memory_space<vmem>>, %arg2: memref<32x64xbf16, #tpu.memory_space<vmem>>, %arg3: memref<1x64xf32, #tpu.memory_space<vmem>>, %arg4: memref<24x64xf32, #tpu.memory_space<vmem>>) attributes {dimension_semantics = [#tpu.dimension_semantics<parallel>], iteration_bounds = array<i64: 1>, scalar_prefetch = 0 : i64, scratch_operands = 0 : i64, tpu.core_type = #tpu.core_type<tc>, window_params = [{transform_indices = @transform_0, window_bounds = array<i64: 24, 32>}, {pipeline_mode = #tpu.pipeline_mode<synchronous>, transform_indices = @transform_1, window_bounds = array<i64: 32, 64>}, {pipeline_mode = #tpu.pipeline_mode<synchronous>, transform_indices = @transform_2, window_bounds = array<i64: 1, 64>}, {transform_indices = @transform_3, window_bounds = array<i64: 24, 64>}]} {
    %c0 = arith.constant 0 : index
    %c0_0 = arith.constant 0 : index
    %0 = vector.load %arg1[%c0, %c0_0] : memref<24x32xbf16, #tpu.memory_space<vmem>>, vector<24x32xbf16>
    %c0_1 = arith.constant 0 : index
    %c0_2 = arith.constant 0 : index
    %1 = vector.load %arg2[%c0_1, %c0_2] : memref<32x64xbf16, #tpu.memory_space<vmem>>, vector<32x64xbf16>
    %cst = arith.constant dense<0.000000e+00> : vector<24x64xf32>
    %2 = tpu.matmul %0, %1, %cst {dimension_numbers = #tpu.dot_dimension_numbers<[1], [0], [0], [1], [0, 0, 1, 1], [], []>} : vector<24x32xbf16>, vector<32x64xbf16>, vector<24x64xf32> -> vector<24x64xf32>
    %c0_3 = arith.constant 0 : index
    %c0_4 = arith.constant 0 : index
    %3 = vector.load %arg3[%c0_3, %c0_4] : memref<1x64xf32, #tpu.memory_space<vmem>>, vector<1x64xf32>
    %4 = vector.broadcast %3 : vector<1x64xf32> to vector<24x64xf32>
    %5 = arith.addf %2, %4 : vector<24x64xf32>
    %cst_5 = arith.constant 0.000000e+00 : f32
    %6 = vector.broadcast %cst_5 : f32 to vector<24x64xf32>
    %7 = arith.cmpf ogt, %5, %6 : vector<24x64xf32>
    %cst_6 = arith.constant 0.000000e+00 : f32
    %8 = vector.broadcast %cst_6 : f32 to vector<24x64xf32>
    %9 = arith.minimumf %5, %8 : vector<24x64xf32>
    %10 = math.exp %9 : vector<24x64xf32>
    %cst_7 = arith.constant 1.000000e+00 : f32
    %11 = vector.broadcast %cst_7 : f32 to vector<24x64xf32>
    %12 = arith.subf %10, %11 : vector<24x64xf32>
    %13 = arith.select %7, %5, %12 : vector<24x64xi1>, vector<24x64xf32>
    %c0_8 = arith.constant 0 : index
    %c0_9 = arith.constant 0 : index
    %14 = vector.load %arg4[%c0_8, %c0_9] : memref<24x64xf32, #tpu.memory_space<vmem>>, vector<24x64xf32>
    tpu.vector_store %arg4[%c0_8, %c0_9], %13 {strides = array<i32>} : memref<24x64xf32, #tpu.memory_space<vmem>>, vector<24x64xf32>,
    return
  }
  func.func @transform_0(%arg0: i32) -> (i32, i32) {
    %c0_i32 = arith.constant 0 : i32
    %c0_i32_0 = arith.constant 0 : i32
    return %arg0, %c0_i32 : i32, i32
  }
  func.func @transform_1(%arg0: i32) -> (i32, i32) {
    %c0_i32 = arith.constant 0 : i32
    %c0_i32_0 = arith.constant 0 : i32
    %c0_i32_1 = arith.constant 0 : i32
    return %c0_i32, %c0_i32_0 : i32, i32
  }
  func.func @transform_2(%arg0: i32) -> (i32, i32) {
    %c0_i32 = arith.constant 0 : i32
    %c0_i32_0 = arith.constant 0 : i32
    %c0_i32_1 = arith.constant 0 : i32
    return %c0_i32, %c0_i32_0 : i32, i32
  }
  func.func @transform_3(%arg0: i32) -> (i32, i32) {
    %c0_i32 = arith.constant 0 : i32
    %c0_i32_0 = arith.constant 0 : i32
    return %arg0, %c0_i32 : i32, i32
  }
}

module attributes {stable_mosaic.version = 11 : i64} {
  func.func @_biaffine_kernel(%arg0: i32, %arg1: memref<1x9x24xbf16, #tpu.memory_space<vmem>>, %arg2: memref<1x24x9xbf16, #tpu.memory_space<vmem>>, %arg3: memref<24x24xbf16, #tpu.memory_space<vmem>>, %arg4: memref<1x9x9xf32, #tpu.memory_space<vmem>>) attributes {dimension_semantics = [#tpu.dimension_semantics<parallel>], iteration_bounds = array<i64: 2>, scalar_prefetch = 0 : i64, scratch_operands = 0 : i64, tpu.core_type = #tpu.core_type<tc>, window_params = [{transform_indices = @transform_0, window_bounds = array<i64: 1, 9, 24>}, {transform_indices = @transform_1, window_bounds = array<i64: 1, 24, 9>}, {pipeline_mode = #tpu.pipeline_mode<synchronous>, transform_indices = @transform_2, window_bounds = array<i64: 24, 24>}, {transform_indices = @transform_3, window_bounds = array<i64: 1, 9, 9>}]} {
    %c0 = arith.constant 0 : index
    %c0_0 = arith.constant 0 : index
    %c0_1 = arith.constant 0 : index
    %0 = vector.load %arg1[%c0, %c0_0, %c0_1] : memref<1x9x24xbf16, #tpu.memory_space<vmem>>, vector<1x9x24xbf16>
    %1 = vector.shape_cast %0 : vector<1x9x24xbf16> to vector<9x24xbf16>
    %c0_2 = arith.constant 0 : index
    %c0_3 = arith.constant 0 : index
    %2 = vector.load %arg3[%c0_2, %c0_3] : memref<24x24xbf16, #tpu.memory_space<vmem>>, vector<24x24xbf16>
    %cst = arith.constant dense<0.000000e+00> : vector<9x24xf32>
    %3 = tpu.matmul %1, %2, %cst {dimension_numbers = #tpu.dot_dimension_numbers<[1], [0], [0], [1], [0, 0, 1, 1], [], []>} : vector<9x24xbf16>, vector<24x24xbf16>, vector<9x24xf32> -> vector<9x24xf32>
    %4 = arith.truncf %3 : vector<9x24xf32> to vector<9x24xbf16>
    %c0_4 = arith.constant 0 : index
    %c0_5 = arith.constant 0 : index
    %c0_6 = arith.constant 0 : index
    %5 = vector.load %arg2[%c0_4, %c0_5, %c0_6] : memref<1x24x9xbf16, #tpu.memory_space<vmem>>, vector<1x24x9xbf16>
    %6 = vector.shape_cast %5 : vector<1x24x9xbf16> to vector<24x9xbf16>
    %cst_7 = arith.constant dense<0.000000e+00> : vector<9x9xf32>
    %7 = tpu.matmul %4, %6, %cst_7 {dimension_numbers = #tpu.dot_dimension_numbers<[1], [0], [0], [1], [0, 0, 1, 1], [], []>} : vector<9x24xbf16>, vector<24x9xbf16>, vector<9x9xf32> -> vector<9x9xf32>
    %c0_8 = arith.constant 0 : index
    %c0_9 = arith.constant 0 : index
    %c0_10 = arith.constant 0 : index
    %8 = vector.load %arg4[%c0_8, %c0_9, %c0_10] : memref<1x9x9xf32, #tpu.memory_space<vmem>>, vector<1x9x9xf32>
    %9 = vector.shape_cast %8 : vector<1x9x9xf32> to vector<9x9xf32>
    %10 = vector.shape_cast %7 : vector<9x9xf32> to vector<1x9x9xf32>
    tpu.vector_store %arg4[%c0_8, %c0_9, %c0_10], %10 {strides = array<i32>} : memref<1x9x9xf32, #tpu.memory_space<vmem>>, vector<1x9x9xf32>,
    return
  }
  func.func @transform_0(%arg0: i32) -> (i32, i32, i32) {
    %c0_i32 = arith.constant 0 : i32
    %c0_i32_0 = arith.constant 0 : i32
    %c0_i32_1 = arith.constant 0 : i32
    return %arg0, %c0_i32, %c0_i32_0 : i32, i32, i32
  }
  func.func @transform_1(%arg0: i32) -> (i32, i32, i32) {
    %c0_i32 = arith.constant 0 : i32
    %c0_i32_0 = arith.constant 0 : i32
    %c0_i32_1 = arith.constant 0 : i32
    return %arg0, %c0_i32, %c0_i32_0 : i32, i32, i32
  }
  func.func @transform_2(%arg0: i32) -> (i32, i32) {
    %c0_i32 = arith.constant 0 : i32
    %c0_i32_0 = arith.constant 0 : i32
    %c0_i32_1 = arith.constant 0 : i32
    return %c0_i32, %c0_i32_0 : i32, i32
  }
  func.func @transform_3(%arg0: i32) -> (i32, i32, i32) {
    %c0_i32 = arith.constant 0 : i32
    %c0_i32_0 = arith.constant 0 : i32
    %c0_i32_1 = arith.constant 0 : i32
    return %arg0, %c0_i32, %c0_i32_0 : i32, i32, i32
  }
}

module attributes {stable_mosaic.version = 11 : i64} {
  func.func @_bilinear_kernel(%arg0: i32, %arg1: memref<40x128xbf16, #tpu.memory_space<vmem>>, %arg2: memref<40x128xbf16, #tpu.memory_space<vmem>>, %arg3: memref<128x1024xbf16, #tpu.memory_space<vmem>>, %arg4: memref<1024x8xf32, #tpu.memory_space<vmem>>, %arg5: memref<128x8xbf16, #tpu.memory_space<vmem>>, %arg6: memref<128x8xbf16, #tpu.memory_space<vmem>>, %arg7: memref<1x8xf32, #tpu.memory_space<vmem>>, %arg8: memref<40x8xf32, #tpu.memory_space<vmem>>) attributes {dimension_semantics = [#tpu.dimension_semantics<parallel>], iteration_bounds = array<i64: 1>, scalar_prefetch = 0 : i64, scratch_operands = 0 : i64, tpu.core_type = #tpu.core_type<tc>, window_params = [{transform_indices = @transform_0, window_bounds = array<i64: 40, 128>}, {transform_indices = @transform_1, window_bounds = array<i64: 40, 128>}, {pipeline_mode = #tpu.pipeline_mode<synchronous>, transform_indices = @transform_2, window_bounds = array<i64: 128, 1024>}, {pipeline_mode = #tpu.pipeline_mode<synchronous>, transform_indices = @transform_3, window_bounds = array<i64: 1024, 8>}, {pipeline_mode = #tpu.pipeline_mode<synchronous>, transform_indices = @transform_4, window_bounds = array<i64: 128, 8>}, {pipeline_mode = #tpu.pipeline_mode<synchronous>, transform_indices = @transform_5, window_bounds = array<i64: 128, 8>}, {pipeline_mode = #tpu.pipeline_mode<synchronous>, transform_indices = @transform_6, window_bounds = array<i64: 1, 8>}, {transform_indices = @transform_7, window_bounds = array<i64: 40, 8>}]} {
    %c0 = arith.constant 0 : index
    %c0_0 = arith.constant 0 : index
    %0 = vector.load %arg1[%c0, %c0_0] : memref<40x128xbf16, #tpu.memory_space<vmem>>, vector<40x128xbf16>
    %c0_1 = arith.constant 0 : index
    %c0_2 = arith.constant 0 : index
    %1 = vector.load %arg2[%c0_1, %c0_2] : memref<40x128xbf16, #tpu.memory_space<vmem>>, vector<40x128xbf16>
    %c0_3 = arith.constant 0 : index
    %c0_4 = arith.constant 0 : index
    %2 = vector.load %arg3[%c0_3, %c0_4] : memref<128x1024xbf16, #tpu.memory_space<vmem>>, vector<128x1024xbf16>
    %cst = arith.constant dense<0.000000e+00> : vector<40x1024xf32>
    %3 = tpu.matmul %0, %2, %cst {dimension_numbers = #tpu.dot_dimension_numbers<[1], [0], [0], [1], [0, 0, 1, 1], [], []>} : vector<40x128xbf16>, vector<128x1024xbf16>, vector<40x1024xf32> -> vector<40x1024xf32>
    %4 = arith.extf %1 : vector<40x128xbf16> to vector<40x128xf32>
    %5 = tpu.concatenate %4, %4, %4, %4, %4, %4, %4, %4 in 1 : vector<40x128xf32>, vector<40x128xf32>, vector<40x128xf32>, vector<40x128xf32>, vector<40x128xf32>, vector<40x128xf32>, vector<40x128xf32>, vector<40x128xf32> -> vector<40x1024xf32>
    %6 = arith.mulf %3, %5 : vector<40x1024xf32>
    %c0_5 = arith.constant 0 : index
    %c0_6 = arith.constant 0 : index
    %7 = vector.load %arg4[%c0_5, %c0_6] : memref<1024x8xf32, #tpu.memory_space<vmem>>, vector<1024x8xf32>
    %cst_7 = arith.constant dense<0.000000e+00> : vector<40x8xf32>
    %8 = tpu.matmul %6, %7, %cst_7 {dimension_numbers = #tpu.dot_dimension_numbers<[1], [0], [0], [1], [0, 0, 1, 1], [], []>} : vector<40x1024xf32>, vector<1024x8xf32>, vector<40x8xf32> -> vector<40x8xf32>
    %c0_8 = arith.constant 0 : index
    %c0_9 = arith.constant 0 : index
    %9 = vector.load %arg5[%c0_8, %c0_9] : memref<128x8xbf16, #tpu.memory_space<vmem>>, vector<128x8xbf16>
    %cst_10 = arith.constant dense<0.000000e+00> : vector<40x8xf32>
    %10 = tpu.matmul %0, %9, %cst_10 {dimension_numbers = #tpu.dot_dimension_numbers<[1], [0], [0], [1], [0, 0, 1, 1], [], []>} : vector<40x128xbf16>, vector<128x8xbf16>, vector<40x8xf32> -> vector<40x8xf32>
    %c0_11 = arith.constant 0 : index
    %c0_12 = arith.constant 0 : index
    %11 = vector.load %arg6[%c0_11, %c0_12] : memref<128x8xbf16, #tpu.memory_space<vmem>>, vector<128x8xbf16>
    %cst_13 = arith.constant dense<0.000000e+00> : vector<40x8xf32>
    %12 = tpu.matmul %1, %11, %cst_13 {dimension_numbers = #tpu.dot_dimension_numbers<[1], [0], [0], [1], [0, 0, 1, 1], [], []>} : vector<40x128xbf16>, vector<128x8xbf16>, vector<40x8xf32> -> vector<40x8xf32>
    %13 = arith.addf %10, %12 : vector<40x8xf32>
    %14 = arith.addf %8, %13 : vector<40x8xf32>
    %c0_14 = arith.constant 0 : index
    %c0_15 = arith.constant 0 : index
    %15 = vector.load %arg7[%c0_14, %c0_15] : memref<1x8xf32, #tpu.memory_space<vmem>>, vector<1x8xf32>
    %16 = vector.broadcast %15 : vector<1x8xf32> to vector<40x8xf32>
    %17 = arith.addf %14, %16 : vector<40x8xf32>
    %c0_16 = arith.constant 0 : index
    %c0_17 = arith.constant 0 : index
    %18 = vector.load %arg8[%c0_16, %c0_17] : memref<40x8xf32, #tpu.memory_space<vmem>>, vector<40x8xf32>
    tpu.vector_store %arg8[%c0_16, %c0_17], %17 {strides = array<i32>} : memref<40x8xf32, #tpu.memory_space<vmem>>, vector<40x8xf32>,
    return
  }
  func.func @transform_0(%arg0: i32) -> (i32, i32) {
    %c0_i32 = arith.constant 0 : i32
    %c0_i32_0 = arith.constant 0 : i32
    return %arg0, %c0_i32 : i32, i32
  }
  func.func @transform_1(%arg0: i32) -> (i32, i32) {
    %c0_i32 = arith.constant 0 : i32
    %c0_i32_0 = arith.constant 0 : i32
    return %arg0, %c0_i32 : i32, i32
  }
  func.func @transform_2(%arg0: i32) -> (i32, i32) {
    %c0_i32 = arith.constant 0 : i32
    %c0_i32_0 = arith.constant 0 : i32
    %c0_i32_1 = arith.constant 0 : i32
    return %c0_i32, %c0_i32_0 : i32, i32
  }
  func.func @transform_3(%arg0: i32) -> (i32, i32) {
    %c0_i32 = arith.constant 0 : i32
    %c0_i32_0 = arith.constant 0 : i32
    %c0_i32_1 = arith.constant 0 : i32
    return %c0_i32, %c0_i32_0 : i32, i32
  }
  func.func @transform_4(%arg0: i32) -> (i32, i32) {
    %c0_i32 = arith.constant 0 : i32
    %c0_i32_0 = arith.constant 0 : i32
    %c0_i32_1 = arith.constant 0 : i32
    return %c0_i32, %c0_i32_0 : i32, i32
  }
  func.func @transform_5(%arg0: i32) -> (i32, i32) {
    %c0_i32 = arith.constant 0 : i32
    %c0_i32_0 = arith.constant 0 : i32
    %c0_i32_1 = arith.constant 0 : i32
    return %c0_i32, %c0_i32_0 : i32, i32
  }
  func.func @transform_6(%arg0: i32) -> (i32, i32) {
    %c0_i32 = arith.constant 0 : i32
    %c0_i32_0 = arith.constant 0 : i32
    %c0_i32_1 = arith.constant 0 : i32
    return %c0_i32, %c0_i32_0 : i32, i32
  }
  func.func @transform_7(%arg0: i32) -> (i32, i32) {
    %c0_i32 = arith.constant 0 : i32
    %c0_i32_0 = arith.constant 0 : i32
    return %arg0, %c0_i32 : i32, i32
  }
}

</mosaic_0001>

<llo_original>
// kernel: deep_biaffine_forward.3
$region0: #{deep_biaffine_forward.3}
  #allocation0 [shape = 'u32[]', space=smem, size = 0x4, offset = 0x4, fixed_abs, tag = 'smem constant byte address 0x4 - core index']
  #allocation1 [shape = 'u32[144,128]{1,0:T(1,128)}', space=vmem, size = 0x12000, scoped, tag = 'internal scratch']
  %s0 = inlined_call_operand.hbm [shape: bf16[24,32], index: 0, kind: input, shape index: {}]
  %s1 = inlined_call_operand.hbm [shape: bf16[32,64], index: 1, kind: input, shape index: {}]
  %s2 = inlined_call_operand.hbm [shape: f32[1,64], index: 2, kind: input, shape index: {}]
  %s3 = inlined_call_operand.hbm [shape: f32[24,64], index: 3, kind: output, shape index: {}]
  %s4 = sld [smem:[#allocation0]]
  $region34: #{deep_biaffine_forward.3} parent=0
    _
  %s6 = ssub.s32 1, %s4
  %s7 = scalar_select 0, %s6, %s4
  $region1: #{deep_biaffine_forward.3} parent=0
    #allocation2 [shape = 'u8[6144]{0}', space=vmem, size = 0x1800, scoped, tag = 'input window, operand 0, single buffered']
    #allocation3 [shape = 's32[1]{0}', space=sflag, size = 0x4, scoped, tag = 'scoped memory for deep_biaffine_forward.3']
    #allocation4 [shape = 's32[1]{0}', space=sflag, size = 0x4, scoped, tag = 'scoped memory for deep_biaffine_forward.3']
    #allocation5 [shape = 'u8[8192]{0}', space=vmem, size = 0x2000, scoped, tag = 'input window, operand 1, single buffered']
    #allocation6 [shape = 's32[1]{0}', space=sflag, size = 0x4, scoped, tag = 'scoped memory for deep_biaffine_forward.3']
    #allocation7 [shape = 'u8[512]{0}', space=vmem, size = 0x400, scoped, tag = 'input window, operand 2, single buffered']
    #allocation8 [shape = 'u8[12288]{0}', space=vmem, size = 0x3000, scoped, tag = 'output window, operand 0, single buffered']
    %8 = vsyncpa [#allocation3], 0
    %9 = vsyncpa [#allocation6], 0
    %10 = vsyncpa [#allocation4], 0
    // Predicated region
    $region2: #{deep_biaffine_forward.3} parent=1 // pred_check
      _
    $region3: #{deep_biaffine_forward.3} parent=1 // pred_check_branch
      %12 = sbr.rel (0) target = $region5
    $region4: #{deep_biaffine_forward.3} parent=1 // pred_region
      %s14 = ssub.s32 192, 192
      %15 = vsyncadd [#allocation3], %s14
      %s16 = sshll.u32 [#allocation2], 4
      %s17 = int_to_ptr.vmem [resolvable:$true] %s16
      %22 = dma.hbm_to_vmem [thread:$0]  %s0, 192, %s17, [#allocation3], 64, 64, 4
    $region5: #{deep_biaffine_forward.3} parent=1 // pred_fallthru
      _
    // Predicated region
    $region6: #{deep_biaffine_forward.3} parent=1 // pred_check
      _
    $region7: #{deep_biaffine_forward.3} parent=1 // pred_check_branch
      %24 = sbr.rel (0) target = $region9
    $region8: #{deep_biaffine_forward.3} parent=1 // pred_region
      %s26 = ssub.s32 256, 256
      %27 = vsyncadd [#allocation6], %s26
      %s28 = sshll.u32 [#allocation5], 4
      %s29 = int_to_ptr.vmem [resolvable:$true] %s28
      %34 = dma.hbm_to_vmem [thread:$0]  %s1, 256, %s29, [#allocation6], 64, 64, 4
    $region9: #{deep_biaffine_forward.3} parent=1 // pred_fallthru
      _
    // Predicated region
    $region10: #{deep_biaffine_forward.3} parent=1 // pred_check
      _
    $region11: #{deep_biaffine_forward.3} parent=1 // pred_check_branch
      %36 = sbr.rel (0) target = $region13
    $region12: #{deep_biaffine_forward.3} parent=1 // pred_region
      %s38 = ssub.s32 16, 16
      %39 = vsyncadd [#allocation6], %s38
      %s41 = sshll.u32 [#allocation7], 4
      %s42 = int_to_ptr.vmem [resolvable:$true] %s41
      %44 = dma.hbm_to_vmem [thread:$0]  %s2, 16, %s42, [#allocation6]
    $region13: #{deep_biaffine_forward.3} parent=1 // pred_fallthru
      _
    // Predicated region
    $region14: #{deep_biaffine_forward.3} parent=1 // pred_check
      _
    $region15: #{deep_biaffine_forward.3} parent=1 // pred_check_branch
      %46 = sbr.rel (0) target = $region17
    $region16: #{deep_biaffine_forward.3} parent=1 // pred_region
      %47 = dma.done [#allocation3], 192
    $region17: #{deep_biaffine_forward.3} parent=1 // pred_fallthru
      _
    // Predicated region
    $region18: #{deep_biaffine_forward.3} parent=1 // pred_check
      _
    $region19: #{deep_biaffine_forward.3} parent=1 // pred_check_branch
      %49 = sbr.rel (0) target = $region21
    $region20: #{deep_biaffine_forward.3} parent=1 // pred_region
      %50 = dma.done [#allocation6], 256
    $region21: #{deep_biaffine_forward.3} parent=1 // pred_fallthru
      _
    // Predicated region
    $region22: #{deep_biaffine_forward.3} parent=1 // pred_check
      _
    $region23: #{deep_biaffine_forward.3} parent=1 // pred_check_branch
      %52 = sbr.rel (0) target = $region25
    $region24: #{deep_biaffine_forward.3} parent=1 // pred_region
      %53 = dma.done [#allocation6], 16
    $region25: #{deep_biaffine_forward.3} parent=1 // pred_fallthru
      _
    %v55 = vld [vmem:[#allocation2] sm:$0xf]
    %v56 = vld [vmem:[#allocation2 + $0x4] sm:$0xf]
    %v57 = vld [vmem:[#allocation2 + $0x8] sm:$0xf]
    %v58 = vld [vmem:[#allocation5] sm:$0xf]
    %v59 = vld [vmem:[#allocation5 + $0x4] sm:$0xf]
    %v60 = vld [vmem:[#allocation5 + $0x8] sm:$0xf]
    %v61 = vld [vmem:[#allocation5 + $0xc] sm:$0xf]
    %v62 = vld [vmem:[#allocation7] sm:$0x1]
    %v64 = vlaneseq
    %v65 = vshrl.u32 %v64, 7
    %v66 = vsub.s32 0, %v65
    %v67 = vrot.slane %v62, %v66
    %v72 = vunpack.c.l.b16 %v55
    %v73 = vunpack.c.l.b16 %v56
    %v74 = vunpack.c.l.b16 %v57
    %v75 = vpack.c.b16 %v73, %v72
    %v76 = vpack.c.b16 %v74, %v74
    %v81 = vunpack.c.l.b16 %v58
    %v82 = vunpack.c.l.b16 %v59
    %v83 = vunpack.c.l.b16 %v60
    %v84 = vunpack.c.l.b16 %v61
    %v85 = vpack.c.b16 %v82, %v81
    %v86 = vpack.c.b16 %v84, %v83
    %vm89 = vcmask 261120
    %v91 = vsel %vm89, %v75, 0
    %v94 = vsel %vm89, %v76, 0
    %96 = vmatprep.subr.bf16.mxu0 0
    %97 = vmatpush1.bf16.msra.mxu0 %v85
    %98 = vmatprep.subr.bf16.mxu0 0
    %99 = vmatpush1.bf16.msra.mxu0 %v86
    %100 = vmatprep.subr.bf16.mxu0 0
    %101 = vmatpush1.bf16.msra.mxu0 0
    %102 = vmatprep.subr.bf16.mxu0 0
    %103 = vmatpush1.bf16.msra.mxu0 0
    %104 = vmatprep.subr.bf16.mxu0 0
    %105 = vmatpush1.bf16.msra.mxu0 0
    %106 = vmatprep.subr.bf16.mxu0 0
    %107 = vmatpush1.bf16.msra.mxu0 0
    %108 = vmatprep.subr.bf16.mxu0 0
    %109 = vmatpush1.bf16.msra.mxu0 0
    %110 = vmatprep.subr.bf16.mxu0 0
    %111 = vmatpush1.bf16.msra.mxu0 0
    %112 = vmatprep.subr.bf16.mxu0 0
    %113 = vmatpush1.bf16.msra.mxu0 0
    %114 = vmatprep.subr.bf16.mxu0 0
    %115 = vmatpush1.bf16.msra.mxu0 0
    %116 = vmatprep.subr.bf16.mxu0 0
    %117 = vmatpush1.bf16.msra.mxu0 0
    %118 = vmatprep.subr.bf16.mxu0 0
    %119 = vmatpush1.bf16.msra.mxu0 0
    %120 = vmatprep.subr.bf16.mxu0 0
    %121 = vmatpush1.bf16.msra.mxu0 0
    %122 = vmatprep.subr.bf16.mxu0 0
    %123 = vmatpush1.bf16.msra.mxu0 0
    %124 = vmatprep.subr.bf16.mxu0 0
    %125 = vmatpush1.bf16.msra.mxu0 0
    %126 = vmatprep.subr.bf16.mxu0 0
    %127 = vmatpush1.bf16.msra.mxu0 0
    %128 = vmatprep.mubr.bf16.mxu0 0
    %129 = vmatmul.mubr.bf16.gmra.mrb[0].mxu0 %v91
    %v130 = vpop.f32.mrb[0].mxu0
    %v131 = vadd.f32 %v67, %v130
    %v132 = vpop.f32.mrb[0].mxu0
    %v133 = vpop.f32.mrb[0].mxu0
    %v134 = vadd.f32 %v67, %v133
    %v135 = vpop.f32.mrb[0].mxu0
    %136 = vmatprep.mubr.bf16.mxu0 0
    %137 = vmatmul.mubr.bf16.gmra.mrb[0].mxu0 %v94
    %v138 = vpop.f32.mrb[0].mxu0
    %v139 = vadd.f32 %v67, %v138
    %v140 = vpop.f32.mrb[0].mxu0
    %v141 = vpop.f32.mrb[0].mxu0
    %v142 = vpop.f32.mrb[0].mxu0
    %143 = vdwg.mxu0
    %vm144 = vcmp.gt.f32.partialorder %v131, 0.0
    %vm145 = vcmp.gt.f32.partialorder %v134, 0.0
    %vm146 = vcmp.gt.f32.partialorder %v139, 0.0
    %v147 = vmin.f32 %v131, 0.0
    %v148 = vmin.f32 %v134, 0.0
    %v149 = vmin.f32 %v139, 0.0
    %v150 = vmul.f32 %v147, 1.442695
    %v151 = vpow.pop %v150
    %v152 = vmul.f32 %v148, 1.442695
    %v153 = vpow.pop %v152
    %v154 = vmul.f32 %v149, 1.442695
    %v155 = vpow.pop %v154
    %v156 = vsub.f32 %v151, 1.0
    %v157 = vsub.f32 %v153, 1.0
    %v158 = vsub.f32 %v155, 1.0
    %v159 = vsel %vm144, %v131, %v156
    %v160 = vsel %vm145, %v134, %v157
    %v161 = vsel %vm146, %v139, %v158
    %vm162 = vcmask 523264
    %163 = vst.msk [vmem:[#allocation8] sm:$0xff] %vm162, %v159
    %164 = vst.msk [vmem:[#allocation8 + $0x8] sm:$0xff] %vm162, %v160
    %165 = vst.msk [vmem:[#allocation8 + $0x10] sm:$0xff] %vm162, %v161
    // Predicated region
    $region26: #{deep_biaffine_forward.3} parent=1 // pred_check
      _
    $region27: #{deep_biaffine_forward.3} parent=1 // pred_check_branch
      %167 = sbr.rel (0) target = $region29
    $region28: #{deep_biaffine_forward.3} parent=1 // pred_region
      %s169 = ssub.s32 384, 384
      %170 = vsyncadd [#allocation4], %s169
      %s171 = sshll.u32 [#allocation8], 4
      %s172 = int_to_ptr.vmem [resolvable:$true] %s171
      %177 = dma.vmem_to_hbm [thread:$0]  %s172, 384, %s3, [#allocation4], 128, 128, 8
    $region29: #{deep_biaffine_forward.3} parent=1 // pred_fallthru
      _
    // Predicated region
    $region30: #{deep_biaffine_forward.3} parent=1 // pred_check
      _
    $region31: #{deep_biaffine_forward.3} parent=1 // pred_check_branch
      %179 = sbr.rel (0) target = $region33
    $region32: #{deep_biaffine_forward.3} parent=1 // pred_region
      %180 = dma.done [#allocation4], 384
    $region33: #{deep_biaffine_forward.3} parent=1 // pred_fallthru
      _
    %181 = vsyncpa [#allocation3], 1
    %182 = vsyncpa [#allocation6], 1
    %183 = vsyncpa [#allocation4], 1

// kernel: deep_biaffine_forward.4
$region0: #{deep_biaffine_forward.4}
  #allocation0 [shape = 'u32[]', space=smem, size = 0x4, offset = 0x4, fixed_abs, tag = 'smem constant byte address 0x4 - core index']
  #allocation1 [shape = 'u32[144,128]{1,0:T(1,128)}', space=vmem, size = 0x12000, scoped, tag = 'internal scratch']
  %s0 = inlined_call_operand.hbm [shape: bf16[2,9,24], index: 0, kind: input, shape index: {}]
  %s1 = inlined_call_operand.hbm [shape: bf16[2,24,9], index: 1, kind: input, shape index: {}]
  %s2 = inlined_call_operand.hbm [shape: bf16[24,24], index: 2, kind: input, shape index: {}]
  %s3 = inlined_call_operand.hbm [shape: f32[2,9,9], index: 3, kind: output, shape index: {}]
  %s4 = sld [smem:[#allocation0]]
  $region57: #{deep_biaffine_forward.4} parent=0
    _
  %s6 = ssub.s32 1, %s4
  %s7 = scalar_select 0, %s6, %s4
  $region1: #{deep_biaffine_forward.4} parent=0
    #allocation2 [shape = 'u8[8192]{0}', space=vmem, size = 0x2000, scoped, tag = 'input window, operand 0']
    #allocation3 [shape = 's32[2]{0}', space=sflag, size = 0x8, scoped, tag = 'scoped memory for deep_biaffine_forward.4']
    #allocation4 [shape = 's32[2]{0}', space=sflag, size = 0x8, scoped, tag = 'scoped memory for deep_biaffine_forward.4']
    #allocation5 [shape = 'u8[12288]{0}', space=vmem, size = 0x3000, scoped, tag = 'input window, operand 1']
    #allocation6 [shape = 's32[2]{0}', space=sflag, size = 0x8, scoped, tag = 'scoped memory for deep_biaffine_forward.4']
    #allocation7 [shape = 'u8[6144]{0}', space=vmem, size = 0x1800, scoped, tag = 'input window, operand 2, single buffered']
    #allocation8 [shape = 'u8[16384]{0}', space=vmem, size = 0x4000, scoped, tag = 'output window, operand 0']
    %8 = vsyncpa [#allocation3], 0
    %s9 = scalar_lea.sflag [#allocation3], 1
    %10 = vsyncpa %s9, 0
    %11 = vsyncpa [#allocation6], 0
    %s12 = scalar_lea.sflag [#allocation6], 1
    %13 = vsyncpa %s12, 0
    %14 = vsyncpa [#allocation4], 0
    %s15 = scalar_lea.sflag [#allocation4], 1
    %16 = vsyncpa %s15, 0
    loop: start=0, step=1, limit=4
    $region2: #{deep_biaffine_forward.4} parent=1 // loop_pre_header
      _
    $region3: #{deep_biaffine_forward.4} parent=1 // loop_header
      %s18 = sphi 0, %s22
      %p19 = scmp.ge.s32.totalorder %s18, 4
      %s28 = sphi 0, %s30
      %s31 = sphi 0, %s28
      %s32 = sphi 0, %s31
      %s48 = sphi 0, %s32
      %s54 = sphi 0, %s56
      %s57 = sphi 0, %s54
      %s58 = sphi 0, %s57
      %s74 = sphi 0, %s58
      %s78 = sphi 0, %s78
      %s80 = sphi 0, %s78
      %s81 = sphi 0, %s80
      %s95 = sphi 0, %s81
      %s101 = sphi 0, %s103
      %s104 = sphi 0, %s101
      %s105 = sphi 0, %s104
      %s121 = sphi 0, %s105
    $region4: #{deep_biaffine_forward.4} parent=1 // loop_header_branch
      %21 = sbr.rel (%p19) target = $region8
    $region5: #{deep_biaffine_forward.4} parent=1 // loop_body
      %s23 = ssub.s32 %s18, 1
      %s24 = ssub.s32 %s18, 2
      %s25 = sadd.s32 %s18, 1
      %s26 = ssub.s32 %s18, %s25
      %p27 = scmp.eq.s32.totalorder %s26, 0
      %s29 = sadd.s32 %s28, 1
      %s30 = scalar_select %p27, %s28, %s29
      %p33 = pneg %p27
      %p34 = scmp.eq.s32.totalorder %s18, 1
      %p35 = por %p33, %p34
      %p36 = scmp.ne.s32.totalorder %s28, %s31
      %p37 = scmp.eq.s32.totalorder %s18, 0
      %p38 = por %p36, %p37
      %p39 = scmp.ne.s32.totalorder %s28, %s31
      %p40 = scmp.eq.s32.totalorder %s23, 1
      %p41 = por %p39, %p40
      %p42 = scmp.ne.s32.totalorder %s31, %s32
      %p43 = scmp.eq.s32.totalorder %s23, 0
      %p44 = por %p42, %p43
      %p45 = scmp.ne.s32.totalorder %s31, %s32
      %p46 = scmp.eq.s32.totalorder %s24, 1
      %p47 = por %p45, %p46
      %p49 = scmp.ne.s32.totalorder %s32, %s48
      %p50 = scmp.eq.s32.totalorder %s24, 0
      %p51 = por %p49, %p50
      %s52 = ssub.s32 %s18, %s25
      %p53 = scmp.eq.s32.totalorder %s52, 0
      %s55 = sadd.s32 %s54, 1
      %s56 = scalar_select %p53, %s54, %s55
      %p59 = pneg %p53
      %p60 = scmp.eq.s32.totalorder %s18, 1
      %p61 = por %p59, %p60
      %p62 = scmp.ne.s32.totalorder %s54, %s57
      %p63 = scmp.eq.s32.totalorder %s18, 0
      %p64 = por %p62, %p63
      %p65 = scmp.ne.s32.totalorder %s54, %s57
      %p66 = scmp.eq.s32.totalorder %s23, 1
      %p67 = por %p65, %p66
      %p68 = scmp.ne.s32.totalorder %s57, %s58
      %p69 = scmp.eq.s32.totalorder %s23, 0
      %p70 = por %p68, %p69
      %p71 = scmp.ne.s32.totalorder %s57, %s58
      %p72 = scmp.eq.s32.totalorder %s24, 1
      %p73 = por %p71, %p72
      %p75 = scmp.ne.s32.totalorder %s58, %s74
      %p76 = scmp.eq.s32.totalorder %s24, 0
      %p77 = por %p75, %p76
      %s79 = sadd.s32 %s78, 1
      %p82 = scmp.eq.s32.totalorder %s18, 1
      %p83 = scmp.ne.s32.totalorder %s78, %s80
      %p84 = scmp.eq.s32.totalorder %s18, 0
      %p85 = por %p83, %p84
      %p86 = scmp.ne.s32.totalorder %s78, %s80
      %p87 = scmp.eq.s32.totalorder %s23, 1
      %p88 = por %p86, %p87
      %p89 = scmp.ne.s32.totalorder %s80, %s81
      %p90 = scmp.eq.s32.totalorder %s23, 0
      %p91 = por %p89, %p90
      %p92 = scmp.ne.s32.totalorder %s80, %s81
      %p93 = scmp.eq.s32.totalorder %s24, 1
      %p94 = por %p92, %p93
      %p96 = scmp.ne.s32.totalorder %s81, %s95
      %p97 = scmp.eq.s32.totalorder %s24, 0
      %p98 = por %p96, %p97
      %s99 = ssub.s32 %s18, %s25
      %p100 = scmp.eq.s32.totalorder %s99, 0
      %s102 = sadd.s32 %s101, 1
      %s103 = scalar_select %p100, %s101, %s102
      %p106 = pneg %p100
      %p107 = scmp.eq.s32.totalorder %s18, 1
      %p108 = por %p106, %p107
      %p109 = scmp.ne.s32.totalorder %s101, %s104
      %p110 = scmp.eq.s32.totalorder %s18, 0
      %p111 = por %p109, %p110
      %p112 = scmp.ne.s32.totalorder %s101, %s104
      %p113 = scmp.eq.s32.totalorder %s23, 1
      %p114 = por %p112, %p113
      %p115 = scmp.ne.s32.totalorder %s104, %s105
      %p116 = scmp.eq.s32.totalorder %s23, 0
      %p117 = por %p115, %p116
      %p118 = scmp.ne.s32.totalorder %s104, %s105
      %p119 = scmp.eq.s32.totalorder %s24, 1
      %p120 = por %p118, %p119
      %p122 = scmp.ne.s32.totalorder %s105, %s121
      %p123 = scmp.eq.s32.totalorder %s24, 0
      %p124 = por %p122, %p123
      %p125 = scmp.le.s32.totalorder 1, %s18
      %p126 = scmp.lt.s32.totalorder %s18, 3
      %p127 = pnand %p125, %p126
      %p128 = pneg %p127
      // Predicated region
      $region9: #{deep_biaffine_forward.4} parent=5 // pred_check
        _
      $region10: #{deep_biaffine_forward.4} parent=5 // pred_check_branch
        %130 = sbr.rel (%p127) target = $region12
      $region11: #{deep_biaffine_forward.4} parent=5 // pred_region
        %s131 = ssub.s32 %s18, 1
        // Predicated region
        $region13: #{deep_biaffine_forward.4} parent=11 // pred_check
          %p132 = pneg %p91
        $region14: #{deep_biaffine_forward.4} parent=11 // pred_check_branch
          %134 = sbr.rel (%p132) target = $region16
        $region15: #{deep_biaffine_forward.4} parent=11 // pred_region
          %s136 = ssub.s32 192, 192
          %137 = vsyncadd [#allocation6], %s136
          %s138 = sshll.u32 [#allocation7], 4
          %s139 = int_to_ptr.vmem [resolvable:$true] %s138
          %144 = dma.hbm_to_vmem [thread:$0]  %s2, 192, %s139, [#allocation6], 64, 64, 4
        $region16: #{deep_biaffine_forward.4} parent=11 // pred_fallthru
          _
      $region12: #{deep_biaffine_forward.4} parent=5 // pred_fallthru
        _
      %p145 = scmp.lt.s32.totalorder %s18, 2
      // Predicated region
      $region17: #{deep_biaffine_forward.4} parent=5 // pred_check
        %p146 = pneg %p145
      $region18: #{deep_biaffine_forward.4} parent=5 // pred_check_branch
        %148 = sbr.rel (%p146) target = $region20
      $region19: #{deep_biaffine_forward.4} parent=5 // pred_region
        // Predicated region
        $region21: #{deep_biaffine_forward.4} parent=19 // pred_check
          %p149 = pneg %p38
        $region22: #{deep_biaffine_forward.4} parent=19 // pred_check_branch
          %151 = sbr.rel (%p149) target = $region24
        $region23: #{deep_biaffine_forward.4} parent=19 // pred_region
          %s152 = sand.u32 %s28, 1
          %s153 = scalar_lea.sflag [#allocation3], %s152
          %s154 = sand.u32 %s28, 1
          %s155 = smul.addr %s154, 8
          %s156 = scalar_lea.vmem [#allocation2], %s155
          %s158 = ssub.s32 128, 128
          %159 = vsyncadd %s153, %s158
          %s160 = smul.addr %s18, 2
          %s161 = smul.addr %s160, 64
          %s162 = scalar_lea.hbm %s0, %s161
          %s163 = sshll.u32 %s156, 4
          %s164 = int_to_ptr.vmem [resolvable:$true] %s163
          %169 = dma.hbm_to_vmem [thread:$0]  %s162, 128, %s164, %s153, 64, 64, 4
        $region24: #{deep_biaffine_forward.4} parent=19 // pred_fallthru
          _
        // Predicated region
        $region25: #{deep_biaffine_forward.4} parent=19 // pred_check
          %p170 = pneg %p64
        $region26: #{deep_biaffine_forward.4} parent=19 // pred_check_branch
          %172 = sbr.rel (%p170) target = $region28
        $region27: #{deep_biaffine_forward.4} parent=19 // pred_region
          %s173 = sand.u32 %s18, 1
          %s174 = scalar_lea.sflag [#allocation6], %s173
          %s175 = sand.u32 %s54, 1
          %s176 = smul.addr %s175, 12
          %s177 = scalar_lea.vmem [#allocation5], %s176
          %s179 = ssub.s32 192, 192
          %180 = vsyncadd %s174, %s179
          %s181 = smul.addr %s18, 3
          %s182 = smul.addr %s181, 64
          %s183 = scalar_lea.hbm %s1, %s182
          %s184 = sshll.u32 %s177, 4
          %s185 = int_to_ptr.vmem [resolvable:$true] %s184
          %190 = dma.hbm_to_vmem [thread:$0]  %s183, 192, %s185, %s174, 64, 64, 4
        $region28: #{deep_biaffine_forward.4} parent=19 // pred_fallthru
          _
      $region20: #{deep_biaffine_forward.4} parent=5 // pred_fallthru
        _
      %p191 = scmp.le.s32.totalorder 1, %s18
      %p192 = scmp.lt.s32.totalorder %s18, 3
      %p193 = pnand %p191, %p192
      %p194 = pneg %p193
      // Predicated region
      $region29: #{deep_biaffine_forward.4} parent=5 // pred_check
        _
      $region30: #{deep_biaffine_forward.4} parent=5 // pred_check_branch
        %196 = sbr.rel (%p193) target = $region32
      $region31: #{deep_biaffine_forward.4} parent=5 // pred_region
        %s197 = ssub.s32 %s18, 1
        %s198 = sand.u32 %s31, 1
        %s199 = scalar_lea.sflag [#allocation3], %s198
        %s200 = sand.u32 %s31, 1
        %s201 = smul.addr %s200, 8
        %s202 = scalar_lea.vmem [#allocation2], %s201
        // Predicated region
        $region33: #{deep_biaffine_forward.4} parent=31 // pred_check
          %p203 = pneg %p44
        $region34: #{deep_biaffine_forward.4} parent=31 // pred_check_branch
          %205 = sbr.rel (%p203) target = $region36
        $region35: #{deep_biaffine_forward.4} parent=31 // pred_region
          %206 = dma.done %s199, 128
        $region36: #{deep_biaffine_forward.4} parent=31 // pred_fallthru
          _
        %s207 = sand.u32 %s23, 1
        %s208 = scalar_lea.sflag [#allocation6], %s207
        %s209 = sand.u32 %s57, 1
        %s210 = smul.addr %s209, 12
        %s211 = scalar_lea.vmem [#allocation5], %s210
        // Predicated region
        $region37: #{deep_biaffine_forward.4} parent=31 // pred_check
          %p212 = pneg %p70
        $region38: #{deep_biaffine_forward.4} parent=31 // pred_check_branch
          %214 = sbr.rel (%p212) target = $region40
        $region39: #{deep_biaffine_forward.4} parent=31 // pred_region
          %215 = dma.done %s208, 192
        $region40: #{deep_biaffine_forward.4} parent=31 // pred_fallthru
          _
        // Predicated region
        $region41: #{deep_biaffine_forward.4} parent=31 // pred_check
          %p216 = pneg %p91
        $region42: #{deep_biaffine_forward.4} parent=31 // pred_check_branch
          %218 = sbr.rel (%p216) target = $region44
        $region43: #{deep_biaffine_forward.4} parent=31 // pred_region
          %219 = dma.done [#allocation6], 192
        $region44: #{deep_biaffine_forward.4} parent=31 // pred_fallthru
          _
        %s220 = sand.u32 %s31, 1
        %s221 = scalar_lea.sflag [#allocation3], %s220
        %s222 = sand.u32 %s31, 1
        %s223 = smul.addr %s222, 8
        %s224 = scalar_lea.vmem [#allocation2], %s223
        %p225 = pneg %p44
        %p226 = pneg %p41
        %s227 = sand.u32 %s23, 1
        %s228 = scalar_lea.sflag [#allocation6], %s227
        %s229 = sand.u32 %s57, 1
        %s230 = smul.addr %s229, 12
        %s231 = scalar_lea.vmem [#allocation5], %s230
        %p232 = pneg %p70
        %p233 = pneg %p67
        %p234 = pneg %p91
        %p235 = pneg %p88
        %p236 = pneg %p117
        %p237 = pneg %p114
        %s238 = sand.u32 %s104, 1
        %s239 = scalar_lea.sflag [#allocation4], %s238
        %s240 = sand.u32 %s104, 1
        %s241 = smul.addr %s240, 16
        %s242 = scalar_lea.vmem [#allocation8], %s241
        %v244 = vld [vmem:[%s202] sm:$0xf]
        %v245 = vld [vmem:[%s202 + $0x4] sm:$0x1]
        %v246 = vld [vmem:[#allocation7] sm:$0xf]
        %v247 = vld [vmem:[#allocation7 + $0x4] sm:$0xf]
        %v248 = vld [vmem:[#allocation7 + $0x8] sm:$0xf]
        %v251 = vunpack.c.l.b16 %v244
        %v252 = vunpack.c.l.b16 %v245
        %v253 = vpack.c.b16 %v252, %v251
        %v257 = vunpack.c.l.b16 %v246
        %v258 = vunpack.c.l.b16 %v247
        %v259 = vunpack.c.l.b16 %v248
        %v260 = vpack.c.b16 %v258, %v257
        %v261 = vpack.c.b16 %v259, %v259
        %vm263 = vcmask 195584
        %v265 = vsel %vm263, %v253, 0
        %vm267 = vcmask 1043456
        %v269 = vsel %vm267, %v261, 0
        %271 = vmatprep.subr.bf16.mxu0 0
        %272 = vmatpush1.bf16.msra.mxu0 %v260
        %273 = vmatprep.subr.bf16.mxu0 0
        %274 = vmatpush1.bf16.msra.mxu0 %v269
        %275 = vmatprep.subr.bf16.mxu0 0
        %276 = vmatpush1.bf16.msra.mxu0 0
        %277 = vmatprep.subr.bf16.mxu0 0
        %278 = vmatpush1.bf16.msra.mxu0 0
        %279 = vmatprep.subr.bf16.mxu0 0
        %280 = vmatpush1.bf16.msra.mxu0 0
        %281 = vmatprep.subr.bf16.mxu0 0
        %282 = vmatpush1.bf16.msra.mxu0 0
        %283 = vmatprep.subr.bf16.mxu0 0
        %284 = vmatpush1.bf16.msra.mxu0 0
        %285 = vmatprep.subr.bf16.mxu0 0
        %286 = vmatpush1.bf16.msra.mxu0 0
        %287 = vmatprep.subr.bf16.mxu0 0
        %288 = vmatpush1.bf16.msra.mxu0 0
        %289 = vmatprep.subr.bf16.mxu0 0
        %290 = vmatpush1.bf16.msra.mxu0 0
        %291 = vmatprep.subr.bf16.mxu0 0
        %292 = vmatpush1.bf16.msra.mxu0 0
        %293 = vmatprep.subr.bf16.mxu0 0
        %294 = vmatpush1.bf16.msra.mxu0 0
        %295 = vmatprep.subr.bf16.mxu0 0
        %296 = vmatpush1.bf16.msra.mxu0 0
        %297 = vmatprep.subr.bf16.mxu0 0
        %298 = vmatpush1.bf16.msra.mxu0 0
        %299 = vmatprep.subr.bf16.mxu0 0
        %300 = vmatpush1.bf16.msra.mxu0 0
        %301 = vmatprep.subr.bf16.mxu0 0
        %302 = vmatpush1.bf16.msra.mxu0 0
        %303 = vmatprep.mubr.bf16.mxu0 0
        %304 = vmatmul.mubr.bf16.gmra.mrb[0].mxu0 %v265
        %v305 = vpop.f32.mrb[0].mxu0
        %v306 = vadd.f32 0.0, %v305
        %v307 = vpop.f32.mrb[0].mxu0
        %v308 = vpop.f32.mrb[0].mxu0
        %v309 = vadd.f32 0.0, %v308
        %v310 = vpop.f32.mrb[0].mxu0
        %311 = vdwg.mxu0
        %v312 = vpack.c.bf16 %v309, %v306
        %v313 = vld [vmem:[%s211] sm:$0xf]
        %v314 = vld [vmem:[%s211 + $0x4] sm:$0xf]
        %v315 = vld [vmem:[%s211 + $0x8] sm:$0xf]
        %v319 = vunpack.c.l.b16 %v313
        %v320 = vunpack.c.l.b16 %v314
        %v321 = vunpack.c.l.b16 %v315
        %v322 = vpack.c.b16 %v320, %v319
        %v323 = vpack.c.b16 %v321, %v321
        %v326 = vsel %vm263, %v312, 0
        %v329 = vsel %vm267, %v323, 0
        %331 = vmatprep.subr.bf16.mxu0 0
        %332 = vmatpush1.bf16.msra.mxu0 %v322
        %333 = vmatprep.subr.bf16.mxu0 0
        %334 = vmatpush1.bf16.msra.mxu0 %v329
        %335 = vmatprep.subr.bf16.mxu0 0
        %336 = vmatpush1.bf16.msra.mxu0 0
        %337 = vmatprep.subr.bf16.mxu0 0
        %338 = vmatpush1.bf16.msra.mxu0 0
        %339 = vmatprep.subr.bf16.mxu0 0
        %340 = vmatpush1.bf16.msra.mxu0 0
        %341 = vmatprep.subr.bf16.mxu0 0
        %342 = vmatpush1.bf16.msra.mxu0 0
        %343 = vmatprep.subr.bf16.mxu0 0
        %344 = vmatpush1.bf16.msra.mxu0 0
        %345 = vmatprep.subr.bf16.mxu0 0
        %346 = vmatpush1.bf16.msra.mxu0 0
        %347 = vmatprep.subr.bf16.mxu0 0
        %348 = vmatpush1.bf16.msra.mxu0 0
        %349 = vmatprep.subr.bf16.mxu0 0
        %350 = vmatpush1.bf16.msra.mxu0 0
        %351 = vmatprep.subr.bf16.mxu0 0
        %352 = vmatpush1.bf16.msra.mxu0 0
        %353 = vmatprep.subr.bf16.mxu0 0
        %354 = vmatpush1.bf16.msra.mxu0 0
        %355 = vmatprep.subr.bf16.mxu0 0
        %356 = vmatpush1.bf16.msra.mxu0 0
        %357 = vmatprep.subr.bf16.mxu0 0
        %358 = vmatpush1.bf16.msra.mxu0 0
        %359 = vmatprep.subr.bf16.mxu0 0
        %360 = vmatpush1.bf16.msra.mxu0 0
        %361 = vmatprep.subr.bf16.mxu0 0
        %362 = vmatpush1.bf16.msra.mxu0 0
        %363 = vmatprep.mubr.bf16.mxu0 0
        %364 = vmatmul.mubr.bf16.gmra.mrb[0].mxu0 %v326
        %v365 = vpop.f32.mrb[0].mxu0
        %v366 = vadd.f32 0.0, %v365
        %v367 = vpop.f32.mrb[0].mxu0
        %v368 = vpop.f32.mrb[0].mxu0
        %v369 = vadd.f32 0.0, %v368
        %v370 = vpop.f32.mrb[0].mxu0
        %371 = vdwg.mxu0
        %vm372 = vcmask 72704
        %373 = vst.msk [vmem:[%s242] sm:$0xff] %vm372, %v366
        %vm374 = vcmask 65536
        %375 = vst.msk [vmem:[%s242 + $0x8] sm:$0x1] %vm374, %v369
        %s376 = sand.u32 %s104, 1
        %s377 = scalar_lea.sflag [#allocation4], %s376
        %s378 = sand.u32 %s104, 1
        %s379 = smul.addr %s378, 16
        %s380 = scalar_lea.vmem [#allocation8], %s379
        // Predicated region
        $region45: #{deep_biaffine_forward.4} parent=31 // pred_check
          %p381 = pneg %p114
        $region46: #{deep_biaffine_forward.4} parent=31 // pred_check_branch
          %383 = sbr.rel (%p381) target = $region48
        $region47: #{deep_biaffine_forward.4} parent=31 // pred_region
          %s385 = ssub.s32 256, 256
          %386 = vsyncadd %s377, %s385
          %s387 = smul.addr %s23, 2
          %s388 = smul.addr %s387, 128
          %s389 = scalar_lea.hbm %s3, %s388
          %s390 = sshll.u32 %s380, 4
          %s391 = int_to_ptr.vmem [resolvable:$true] %s390
          %396 = dma.vmem_to_hbm [thread:$0]  %s391, 256, %s389, %s377, 128, 128, 8
        $region48: #{deep_biaffine_forward.4} parent=31 // pred_fallthru
          _
      $region32: #{deep_biaffine_forward.4} parent=5 // pred_fallthru
        _
      %p397 = scmp.le.s32.totalorder 2, %s18
      // Predicated region
      $region49: #{deep_biaffine_forward.4} parent=5 // pred_check
        %p398 = pneg %p397
      $region50: #{deep_biaffine_forward.4} parent=5 // pred_check_branch
        %400 = sbr.rel (%p398) target = $region52
      $region51: #{deep_biaffine_forward.4} parent=5 // pred_region
        %s401 = ssub.s32 %s18, 2
        // Predicated region
        $region53: #{deep_biaffine_forward.4} parent=51 // pred_check
          %p402 = pneg %p120
        $region54: #{deep_biaffine_forward.4} parent=51 // pred_check_branch
          %404 = sbr.rel (%p402) target = $region56
        $region55: #{deep_biaffine_forward.4} parent=51 // pred_region
          %s405 = sand.u32 %s105, 1
          %s406 = scalar_lea.sflag [#allocation4], %s405
          %s407 = sand.u32 %s105, 1
          %s408 = smul.addr %s407, 16
          %s409 = scalar_lea.vmem [#allocation8], %s408
          %410 = dma.done %s406, 256
        $region56: #{deep_biaffine_forward.4} parent=51 // pred_fallthru
          _
      $region52: #{deep_biaffine_forward.4} parent=5 // pred_fallthru
        _
    $region6: #{deep_biaffine_forward.4} parent=1 // loop_footer
      %s22 = sadd.s32 1, %s18
    $region7: #{deep_biaffine_forward.4} parent=1 // loop_footer_branch
      %17 = sbr.rel target = $region3
    $region8: #{deep_biaffine_forward.4} parent=1 // loop_exit
      _
    %411 = vsyncpa [#allocation3], 1
    %s412 = scalar_lea.sflag [#allocation3], 1
    %413 = vsyncpa %s412, 1
    %414 = vsyncpa [#allocation6], 1
    %s415 = scalar_lea.sflag [#allocation6], 1
    %416 = vsyncpa %s415, 1
    %417 = vsyncpa [#allocation4], 1
    %s418 = scalar_lea.sflag [#allocation4], 1
    %419 = vsyncpa %s418, 1

// kernel: deep_biaffine_forward.5
$region0: #{deep_biaffine_forward.5}
  #allocation0 [shape = 'u32[]', space=smem, size = 0x4, offset = 0x4, fixed_abs, tag = 'smem constant byte address 0x4 - core index']
  #allocation1 [shape = 'u32[144,128]{1,0:T(1,128)}', space=vmem, size = 0x12000, scoped, tag = 'internal scratch']
  %s0 = inlined_call_operand.hbm [shape: bf16[40,128], index: 0, kind: input, shape index: {}]
  %s1 = inlined_call_operand.hbm [shape: bf16[40,128], index: 1, kind: input, shape index: {}]
  %s2 = inlined_call_operand.hbm [shape: bf16[128,1024], index: 2, kind: input, shape index: {}]
  %s3 = inlined_call_operand.hbm [shape: f32[1024,8], index: 3, kind: input, shape index: {}]
  %s4 = inlined_call_operand.hbm [shape: bf16[128,8], index: 4, kind: input, shape index: {}]
  %s5 = inlined_call_operand.hbm [shape: bf16[128,8], index: 5, kind: input, shape index: {}]
  %s6 = inlined_call_operand.hbm [shape: f32[1,8], index: 6, kind: input, shape index: {}]
  %s7 = inlined_call_operand.hbm [shape: f32[40,8], index: 7, kind: output, shape index: {}]
  %s8 = sld [smem:[#allocation0]]
  $region66: #{deep_biaffine_forward.5} parent=0
    _
  %s10 = ssub.s32 1, %s8
  %s11 = scalar_select 0, %s10, %s8
  $region1: #{deep_biaffine_forward.5} parent=0
    #allocation2 [shape = 'u8[10240]{0}', space=vmem, size = 0x2800, scoped, tag = 'input window, operand 0, single buffered']
    #allocation3 [shape = 's32[1]{0}', space=sflag, size = 0x4, scoped, tag = 'scoped memory for deep_biaffine_forward.5']
    #allocation4 [shape = 's32[1]{0}', space=sflag, size = 0x4, scoped, tag = 'scoped memory for deep_biaffine_forward.5']
    #allocation5 [shape = 'u8[10240]{0}', space=vmem, size = 0x2800, scoped, tag = 'input window, operand 1, single buffered']
    #allocation6 [shape = 's32[1]{0}', space=sflag, size = 0x4, scoped, tag = 'scoped memory for deep_biaffine_forward.5']
    #allocation7 [shape = 'u8[262144]{0}', space=vmem, size = 0x40000, scoped, tag = 'input window, operand 2, single buffered']
    #allocation8 [shape = 'u8[524288]{0}', space=vmem, size = 0x80000, scoped, tag = 'input window, operand 3, single buffered']
    #allocation9 [shape = 's32[1]{0}', space=sflag, size = 0x4, scoped, tag = 'scoped memory for deep_biaffine_forward.5']
    #allocation10 [shape = 'u8[32768]{0}', space=vmem, size = 0x8000, scoped, tag = 'input window, operand 4, single buffered']
    #allocation11 [shape = 'u8[32768]{0}', space=vmem, size = 0x8000, scoped, tag = 'input window, operand 5, single buffered']
    #allocation12 [shape = 's32[1]{0}', space=sflag, size = 0x4, scoped, tag = 'scoped memory for deep_biaffine_forward.5']
    #allocation13 [shape = 'u8[512]{0}', space=vmem, size = 0x400, scoped, tag = 'input window, operand 6, single buffered']
    #allocation14 [shape = 'u8[20480]{0}', space=vmem, size = 0x5000, scoped, tag = 'output window, operand 0, single buffered']
    %12 = vsyncpa [#allocation3], 0
    %13 = vsyncpa [#allocation6], 0
    %14 = vsyncpa [#allocation9], 0
    %15 = vsyncpa [#allocation12], 0
    %16 = vsyncpa [#allocation4], 0
    // Predicated region
    $region2: #{deep_biaffine_forward.5} parent=1 // pred_check
      _
    $region3: #{deep_biaffine_forward.5} parent=1 // pred_check_branch
      %18 = sbr.rel (0) target = $region5
    $region4: #{deep_biaffine_forward.5} parent=1 // pred_region
      %s20 = ssub.s32 320, 320
      %21 = vsyncadd [#allocation3], %s20
      %s22 = sshll.u32 [#allocation2], 4
      %s23 = int_to_ptr.vmem [resolvable:$true] %s22
      %28 = dma.hbm_to_vmem [thread:$0]  %s0, 320, %s23, [#allocation3], 64, 64, 4
    $region5: #{deep_biaffine_forward.5} parent=1 // pred_fallthru
      _
    // Predicated region
    $region6: #{deep_biaffine_forward.5} parent=1 // pred_check
      _
    $region7: #{deep_biaffine_forward.5} parent=1 // pred_check_branch
      %30 = sbr.rel (0) target = $region9
    $region8: #{deep_biaffine_forward.5} parent=1 // pred_region
      %s32 = ssub.s32 320, 320
      %33 = vsyncadd [#allocation6], %s32
      %s34 = sshll.u32 [#allocation5], 4
      %s35 = int_to_ptr.vmem [resolvable:$true] %s34
      %40 = dma.hbm_to_vmem [thread:$0]  %s1, 320, %s35, [#allocation6], 64, 64, 4
    $region9: #{deep_biaffine_forward.5} parent=1 // pred_fallthru
      _
    // Predicated region
    $region10: #{deep_biaffine_forward.5} parent=1 // pred_check
      _
    $region11: #{deep_biaffine_forward.5} parent=1 // pred_check_branch
      %42 = sbr.rel (0) target = $region13
    $region12: #{deep_biaffine_forward.5} parent=1 // pred_region
      %s44 = ssub.s32 8192, 8192
      %45 = vsyncadd [#allocation6], %s44
      %s46 = sshll.u32 [#allocation7], 4
      %s47 = int_to_ptr.vmem [resolvable:$true] %s46
      %52 = dma.hbm_to_vmem [thread:$0]  %s2, 8192, %s47, [#allocation6], 512, 512, 32
    $region13: #{deep_biaffine_forward.5} parent=1 // pred_fallthru
      _
    // Predicated region
    $region14: #{deep_biaffine_forward.5} parent=1 // pred_check
      _
    $region15: #{deep_biaffine_forward.5} parent=1 // pred_check_branch
      %54 = sbr.rel (0) target = $region17
    $region16: #{deep_biaffine_forward.5} parent=1 // pred_region
      %s56 = ssub.s32 16384, 16384
      %57 = vsyncadd [#allocation9], %s56
      %s58 = sshll.u32 [#allocation8], 4
      %s59 = int_to_ptr.vmem [resolvable:$true] %s58
      %64 = dma.hbm_to_vmem [thread:$0]  %s3, 16384, %s59, [#allocation9], 128, 128, 8
    $region17: #{deep_biaffine_forward.5} parent=1 // pred_fallthru
      _
    // Predicated region
    $region18: #{deep_biaffine_forward.5} parent=1 // pred_check
      _
    $region19: #{deep_biaffine_forward.5} parent=1 // pred_check_branch
      %66 = sbr.rel (0) target = $region21
    $region20: #{deep_biaffine_forward.5} parent=1 // pred_region
      %s68 = ssub.s32 1024, 1024
      %69 = vsyncadd [#allocation9], %s68
      %s70 = sshll.u32 [#allocation10], 4
      %s71 = int_to_ptr.vmem [resolvable:$true] %s70
      %76 = dma.hbm_to_vmem [thread:$0]  %s4, 1024, %s71, [#allocation9], 64, 64, 4
    $region21: #{deep_biaffine_forward.5} parent=1 // pred_fallthru
      _
    // Predicated region
    $region22: #{deep_biaffine_forward.5} parent=1 // pred_check
      _
    $region23: #{deep_biaffine_forward.5} parent=1 // pred_check_branch
      %78 = sbr.rel (0) target = $region25
    $region24: #{deep_biaffine_forward.5} parent=1 // pred_region
      %s80 = ssub.s32 1024, 1024
      %81 = vsyncadd [#allocation12], %s80
      %s82 = sshll.u32 [#allocation11], 4
      %s83 = int_to_ptr.vmem [resolvable:$true] %s82
      %88 = dma.hbm_to_vmem [thread:$0]  %s5, 1024, %s83, [#allocation12], 64, 64, 4
    $region25: #{deep_biaffine_forward.5} parent=1 // pred_fallthru
      _
    // Predicated region
    $region26: #{deep_biaffine_forward.5} parent=1 // pred_check
      _
    $region27: #{deep_biaffine_forward.5} parent=1 // pred_check_branch
      %90 = sbr.rel (0) target = $region29
    $region28: #{deep_biaffine_forward.5} parent=1 // pred_region
      %s92 = ssub.s32 16, 16
      %93 = vsyncadd [#allocation12], %s92
      %s95 = sshll.u32 [#allocation13], 4
      %s96 = int_to_ptr.vmem [resolvable:$true] %s95
      %98 = dma.hbm_to_vmem [thread:$0]  %s6, 16, %s96, [#allocation12]
    $region29: #{deep_biaffine_forward.5} parent=1 // pred_fallthru
      _
    // Predicated region
    $region30: #{deep_biaffine_forward.5} parent=1 // pred_check
      _
    $region31: #{deep_biaffine_forward.5} parent=1 // pred_check_branch
      %100 = sbr.rel (0) target = $region33
    $region32: #{deep_biaffine_forward.5} parent=1 // pred_region
      %101 = dma.done [#allocation3], 320
    $region33: #{deep_biaffine_forward.5} parent=1 // pred_fallthru
      _
    // Predicated region
    $region34: #{deep_biaffine_forward.5} parent=1 // pred_check
      _
    $region35: #{deep_biaffine_forward.5} parent=1 // pred_check_branch
      %103 = sbr.rel (0) target = $region37
    $region36: #{deep_biaffine_forward.5} parent=1 // pred_region
      %104 = dma.done [#allocation6], 320
    $region37: #{deep_biaffine_forward.5} parent=1 // pred_fallthru
      _
    // Predicated region
    $region38: #{deep_biaffine_forward.5} parent=1 // pred_check
      _
    $region39: #{deep_biaffine_forward.5} parent=1 // pred_check_branch
      %106 = sbr.rel (0) target = $region41
    $region40: #{deep_biaffine_forward.5} parent=1 // pred_region
      %107 = dma.done [#allocation6], 8192
    $region41: #{deep_biaffine_forward.5} parent=1 // pred_fallthru
      _
    // Predicated region
    $region42: #{deep_biaffine_forward.5} parent=1 // pred_check
      _
    $region43: #{deep_biaffine_forward.5} parent=1 // pred_check_branch
      %109 = sbr.rel (0) target = $region45
    $region44: #{deep_biaffine_forward.5} parent=1 // pred_region
      %110 = dma.done [#allocation9], 16384
    $region45: #{deep_biaffine_forward.5} parent=1 // pred_fallthru
      _
    // Predicated region
    $region46: #{deep_biaffine_forward.5} parent=1 // pred_check
      _
    $region47: #{deep_biaffine_forward.5} parent=1 // pred_check_branch
      %112 = sbr.rel (0) target = $region49
    $region48: #{deep_biaffine_forward.5} parent=1 // pred_region
      %113 = dma.done [#allocation9], 1024
    $region49: #{deep_biaffine_forward.5} parent=1 // pred_fallthru
      _
    // Predicated region
    $region50: #{deep_biaffine_forward.5} parent=1 // pred_check
      _
    $region51: #{deep_biaffine_forward.5} parent=1 // pred_check_branch
      %115 = sbr.rel (0) target = $region53
    $region52: #{deep_biaffine_forward.5} parent=1 // pred_region
      %116 = dma.done [#allocation12], 1024
    $region53: #{deep_biaffine_forward.5} parent=1 // pred_fallthru
      _
    // Predicated region
    $region54: #{deep_biaffine_forward.5} parent=1 // pred_check
      _
    $region55: #{deep_biaffine_forward.5} parent=1 // pred_check_branch
      %118 = sbr.rel (0) target = $region57
    $region56: #{deep_biaffine_forward.5} parent=1 // pred_region
      %119 = dma.done [#allocation12], 16
    $region57: #{deep_biaffine_forward.5} parent=1 // pred_fallthru
      _
    %v121 = vld [vmem:[#allocation2] sm:$0xf]
    %v122 = vld [vmem:[#allocation2 + $0x4] sm:$0xf]
    %v123 = vld [vmem:[#allocation2 + $0x8] sm:$0xf]
    %v124 = vld [vmem:[#allocation2 + $0xc] sm:$0xf]
    %v125 = vld [vmem:[#allocation2 + $0x10] sm:$0xf]
    %v126 = vld [vmem:[#allocation5] sm:$0xf]
    %v127 = vld [vmem:[#allocation5 + $0x4] sm:$0xf]
    %v128 = vld [vmem:[#allocation5 + $0x8] sm:$0xf]
    %v129 = vld [vmem:[#allocation5 + $0xc] sm:$0xf]
    %v130 = vld [vmem:[#allocation5 + $0x10] sm:$0xf]
    %v131 = vld [vmem:[#allocation7] sm:$0xff]
    %v132 = vld [vmem:[#allocation7 + $0x8] sm:$0xff]
    %v133 = vld [vmem:[#allocation7 + $0x10] sm:$0xff]
    %v134 = vld [vmem:[#allocation7 + $0x18] sm:$0xff]
    %v135 = vld [vmem:[#allocation7 + $0x20] sm:$0xff]
    %v136 = vld [vmem:[#allocation7 + $0x28] sm:$0xff]
    %v137 = vld [vmem:[#allocation7 + $0x30] sm:$0xff]
    %v138 = vld [vmem:[#allocation7 + $0x38] sm:$0xff]
    %v139 = vld [vmem:[#allocation7 + $0x40] sm:$0xff]
    %v140 = vld [vmem:[#allocation7 + $0x48] sm:$0xff]
    %v141 = vld [vmem:[#allocation7 + $0x50] sm:$0xff]
    %v142 = vld [vmem:[#allocation7 + $0x58] sm:$0xff]
    %v143 = vld [vmem:[#allocation7 + $0x60] sm:$0xff]
    %v144 = vld [vmem:[#allocation7 + $0x68] sm:$0xff]
    %v145 = vld [vmem:[#allocation7 + $0x70] sm:$0xff]
    %v146 = vld [vmem:[#allocation7 + $0x78] sm:$0xff]
    %v147 = vld [vmem:[#allocation7 + $0x80] sm:$0xff]
    %v148 = vld [vmem:[#allocation7 + $0x88] sm:$0xff]
    %v149 = vld [vmem:[#allocation7 + $0x90] sm:$0xff]
    %v150 = vld [vmem:[#allocation7 + $0x98] sm:$0xff]
    %v151 = vld [vmem:[#allocation7 + $0xa0] sm:$0xff]
    %v152 = vld [vmem:[#allocation7 + $0xa8] sm:$0xff]
    %v153 = vld [vmem:[#allocation7 + $0xb0] sm:$0xff]
    %v154 = vld [vmem:[#allocation7 + $0xb8] sm:$0xff]
    %v155 = vld [vmem:[#allocation7 + $0xc0] sm:$0xff]
    %v156 = vld [vmem:[#allocation7 + $0xc8] sm:$0xff]
    %v157 = vld [vmem:[#allocation7 + $0xd0] sm:$0xff]
    %v158 = vld [vmem:[#allocation7 + $0xd8] sm:$0xff]
    %v159 = vld [vmem:[#allocation7 + $0xe0] sm:$0xff]
    %v160 = vld [vmem:[#allocation7 + $0xe8] sm:$0xff]
    %v161 = vld [vmem:[#allocation7 + $0xf0] sm:$0xff]
    %v162 = vld [vmem:[#allocation7 + $0xf8] sm:$0xff]
    %v163 = vld [vmem:[#allocation7 + $0x100] sm:$0xff]
    %v164 = vld [vmem:[#allocation7 + $0x108] sm:$0xff]
    %v165 = vld [vmem:[#allocation7 + $0x110] sm:$0xff]
    %v166 = vld [vmem:[#allocation7 + $0x118] sm:$0xff]
    %v167 = vld [vmem:[#allocation7 + $0x120] sm:$0xff]
    %v168 = vld [vmem:[#allocation7 + $0x128] sm:$0xff]
    %v169 = vld [vmem:[#allocation7 + $0x130] sm:$0xff]
    %v170 = vld [vmem:[#allocation7 + $0x138] sm:$0xff]
    %v171 = vld [vmem:[#allocation7 + $0x140] sm:$0xff]
    %v172 = vld [vmem:[#allocation7 + $0x148] sm:$0xff]
    %v173 = vld [vmem:[#allocation7 + $0x150] sm:$0xff]
    %v174 = vld [vmem:[#allocation7 + $0x158] sm:$0xff]
    %v175 = vld [vmem:[#allocation7 + $0x160] sm:$0xff]
    %v176 = vld [vmem:[#allocation7 + $0x168] sm:$0xff]
    %v177 = vld [vmem:[#allocation7 + $0x170] sm:$0xff]
    %v178 = vld [vmem:[#allocation7 + $0x178] sm:$0xff]
    %v179 = vld [vmem:[#allocation7 + $0x180] sm:$0xff]
    %v180 = vld [vmem:[#allocation7 + $0x188] sm:$0xff]
    %v181 = vld [vmem:[#allocation7 + $0x190] sm:$0xff]
    %v182 = vld [vmem:[#allocation7 + $0x198] sm:$0xff]
    %v183 = vld [vmem:[#allocation7 + $0x1a0] sm:$0xff]
    %v184 = vld [vmem:[#allocation7 + $0x1a8] sm:$0xff]
    %v185 = vld [vmem:[#allocation7 + $0x1b0] sm:$0xff]
    %v186 = vld [vmem:[#allocation7 + $0x1b8] sm:$0xff]
    %v187 = vld [vmem:[#allocation7 + $0x1c0] sm:$0xff]
    %v188 = vld [vmem:[#allocation7 + $0x1c8] sm:$0xff]
    %v189 = vld [vmem:[#allocation7 + $0x1d0] sm:$0xff]
    %v190 = vld [vmem:[#allocation7 + $0x1d8] sm:$0xff]
    %v191 = vld [vmem:[#allocation7 + $0x1e0] sm:$0xff]
    %v192 = vld [vmem:[#allocation7 + $0x1e8] sm:$0xff]
    %v193 = vld [vmem:[#allocation7 + $0x1f0] sm:$0xff]
    %v194 = vld [vmem:[#allocation7 + $0x1f8] sm:$0xff]
    %v200 = vunpack.c.l.b16 %v121
    %v201 = vunpack.c.l.b16 %v122
    %v202 = vunpack.c.l.b16 %v123
    %v203 = vunpack.c.l.b16 %v124
    %v204 = vunpack.c.l.b16 %v125
    %v205 = vpack.c.b16 %v201, %v200
    %v206 = vpack.c.b16 %v203, %v202
    %v207 = vpack.c.b16 %v204, %v204
    %v275 = vunpack.c.l.b16 %v131
    %v276 = vunpack.c.h.b16 %v131
    %v277 = vunpack.c.l.b16 %v132
    %v278 = vunpack.c.h.b16 %v132
    %v279 = vunpack.c.l.b16 %v133
    %v280 = vunpack.c.h.b16 %v133
    %v281 = vunpack.c.l.b16 %v134
    %v282 = vunpack.c.h.b16 %v134
    %v283 = vunpack.c.l.b16 %v135
    %v284 = vunpack.c.h.b16 %v135
    %v285 = vunpack.c.l.b16 %v136
    %v286 = vunpack.c.h.b16 %v136
    %v287 = vunpack.c.l.b16 %v137
    %v288 = vunpack.c.h.b16 %v137
    %v289 = vunpack.c.l.b16 %v138
    %v290 = vunpack.c.h.b16 %v138
    %v291 = vunpack.c.l.b16 %v139
    %v292 = vunpack.c.h.b16 %v139
    %v293 = vunpack.c.l.b16 %v140
    %v294 = vunpack.c.h.b16 %v140
    %v295 = vunpack.c.l.b16 %v141
    %v296 = vunpack.c.h.b16 %v141
    %v297 = vunpack.c.l.b16 %v142
    %v298 = vunpack.c.h.b16 %v142
    %v299 = vunpack.c.l.b16 %v143
    %v300 = vunpack.c.h.b16 %v143
    %v301 = vunpack.c.l.b16 %v144
    %v302 = vunpack.c.h.b16 %v144
    %v303 = vunpack.c.l.b16 %v145
    %v304 = vunpack.c.h.b16 %v145
    %v305 = vunpack.c.l.b16 %v146
    %v306 = vunpack.c.h.b16 %v146
    %v307 = vunpack.c.l.b16 %v147
    %v308 = vunpack.c.h.b16 %v147
    %v309 = vunpack.c.l.b16 %v148
    %v310 = vunpack.c.h.b16 %v148
    %v311 = vunpack.c.l.b16 %v149
    %v312 = vunpack.c.h.b16 %v149
    %v313 = vunpack.c.l.b16 %v150
    %v314 = vunpack.c.h.b16 %v150
    %v315 = vunpack.c.l.b16 %v151
    %v316 = vunpack.c.h.b16 %v151
    %v317 = vunpack.c.l.b16 %v152
    %v318 = vunpack.c.h.b16 %v152
    %v319 = vunpack.c.l.b16 %v153
    %v320 = vunpack.c.h.b16 %v153
    %v321 = vunpack.c.l.b16 %v154
    %v322 = vunpack.c.h.b16 %v154
    %v323 = vunpack.c.l.b16 %v155
    %v324 = vunpack.c.h.b16 %v155
    %v325 = vunpack.c.l.b16 %v156
    %v326 = vunpack.c.h.b16 %v156
    %v327 = vunpack.c.l.b16 %v157
    %v328 = vunpack.c.h.b16 %v157
    %v329 = vunpack.c.l.b16 %v158
    %v330 = vunpack.c.h.b16 %v158
    %v331 = vunpack.c.l.b16 %v159
    %v332 = vunpack.c.h.b16 %v159
    %v333 = vunpack.c.l.b16 %v160
    %v334 = vunpack.c.h.b16 %v160
    %v335 = vunpack.c.l.b16 %v161
    %v336 = vunpack.c.h.b16 %v161
    %v337 = vunpack.c.l.b16 %v162
    %v338 = vunpack.c.h.b16 %v162
    %v339 = vunpack.c.l.b16 %v163
    %v340 = vunpack.c.h.b16 %v163
    %v341 = vunpack.c.l.b16 %v164
    %v342 = vunpack.c.h.b16 %v164
    %v343 = vunpack.c.l.b16 %v165
    %v344 = vunpack.c.h.b16 %v165
    %v345 = vunpack.c.l.b16 %v166
    %v346 = vunpack.c.h.b16 %v166
    %v347 = vunpack.c.l.b16 %v167
    %v348 = vunpack.c.h.b16 %v167
    %v349 = vunpack.c.l.b16 %v168
    %v350 = vunpack.c.h.b16 %v168
    %v351 = vunpack.c.l.b16 %v169
    %v352 = vunpack.c.h.b16 %v169
    %v353 = vunpack.c.l.b16 %v170
    %v354 = vunpack.c.h.b16 %v170
    %v355 = vunpack.c.l.b16 %v171
    %v356 = vunpack.c.h.b16 %v171
    %v357 = vunpack.c.l.b16 %v172
    %v358 = vunpack.c.h.b16 %v172
    %v359 = vunpack.c.l.b16 %v173
    %v360 = vunpack.c.h.b16 %v173
    %v361 = vunpack.c.l.b16 %v174
    %v362 = vunpack.c.h.b16 %v174
    %v363 = vunpack.c.l.b16 %v175
    %v364 = vunpack.c.h.b16 %v175
    %v365 = vunpack.c.l.b16 %v176
    %v366 = vunpack.c.h.b16 %v176
    %v367 = vunpack.c.l.b16 %v177
    %v368 = vunpack.c.h.b16 %v177
    %v369 = vunpack.c.l.b16 %v178
    %v370 = vunpack.c.h.b16 %v178
    %v371 = vunpack.c.l.b16 %v179
    %v372 = vunpack.c.h.b16 %v179
    %v373 = vunpack.c.l.b16 %v180
    %v374 = vunpack.c.h.b16 %v180
    %v375 = vunpack.c.l.b16 %v181
    %v376 = vunpack.c.h.b16 %v181
    %v377 = vunpack.c.l.b16 %v182
    %v378 = vunpack.c.h.b16 %v182
    %v379 = vunpack.c.l.b16 %v183
    %v380 = vunpack.c.h.b16 %v183
    %v381 = vunpack.c.l.b16 %v184
    %v382 = vunpack.c.h.b16 %v184
    %v383 = vunpack.c.l.b16 %v185
    %v384 = vunpack.c.h.b16 %v185
    %v385 = vunpack.c.l.b16 %v186
    %v386 = vunpack.c.h.b16 %v186
    %v387 = vunpack.c.l.b16 %v187
    %v388 = vunpack.c.h.b16 %v187
    %v389 = vunpack.c.l.b16 %v188
    %v390 = vunpack.c.h.b16 %v188
    %v391 = vunpack.c.l.b16 %v189
    %v392 = vunpack.c.h.b16 %v189
    %v393 = vunpack.c.l.b16 %v190
    %v394 = vunpack.c.h.b16 %v190
    %v395 = vunpack.c.l.b16 %v191
    %v396 = vunpack.c.h.b16 %v191
    %v397 = vunpack.c.l.b16 %v192
    %v398 = vunpack.c.h.b16 %v192
    %v399 = vunpack.c.l.b16 %v193
    %v400 = vunpack.c.h.b16 %v193
    %v401 = vunpack.c.l.b16 %v194
    %v402 = vunpack.c.h.b16 %v194
    %v403 = vpack.c.b16 %v283, %v275
    %v404 = vpack.c.b16 %v284, %v276
    %v405 = vpack.c.b16 %v285, %v277
    %v406 = vpack.c.b16 %v286, %v278
    %v407 = vpack.c.b16 %v287, %v279
    %v408 = vpack.c.b16 %v288, %v280
    %v409 = vpack.c.b16 %v289, %v281
    %v410 = vpack.c.b16 %v290, %v282
    %v411 = vpack.c.b16 %v299, %v291
    %v412 = vpack.c.b16 %v300, %v292
    %v413 = vpack.c.b16 %v301, %v293
    %v414 = vpack.c.b16 %v302, %v294
    %v415 = vpack.c.b16 %v303, %v295
    %v416 = vpack.c.b16 %v304, %v296
    %v417 = vpack.c.b16 %v305, %v297
    %v418 = vpack.c.b16 %v306, %v298
    %v419 = vpack.c.b16 %v315, %v307
    %v420 = vpack.c.b16 %v316, %v308
    %v421 = vpack.c.b16 %v317, %v309
    %v422 = vpack.c.b16 %v318, %v310
    %v423 = vpack.c.b16 %v319, %v311
    %v424 = vpack.c.b16 %v320, %v312
    %v425 = vpack.c.b16 %v321, %v313
    %v426 = vpack.c.b16 %v322, %v314
    %v427 = vpack.c.b16 %v331, %v323
    %v428 = vpack.c.b16 %v332, %v324
    %v429 = vpack.c.b16 %v333, %v325
    %v430 = vpack.c.b16 %v334, %v326
    %v431 = vpack.c.b16 %v335, %v327
    %v432 = vpack.c.b16 %v336, %v328
    %v433 = vpack.c.b16 %v337, %v329
    %v434 = vpack.c.b16 %v338, %v330
    %v435 = vpack.c.b16 %v347, %v339
    %v436 = vpack.c.b16 %v348, %v340
    %v437 = vpack.c.b16 %v349, %v341
    %v438 = vpack.c.b16 %v350, %v342
    %v439 = vpack.c.b16 %v351, %v343
    %v440 = vpack.c.b16 %v352, %v344
    %v441 = vpack.c.b16 %v353, %v345
    %v442 = vpack.c.b16 %v354, %v346
    %v443 = vpack.c.b16 %v363, %v355
    %v444 = vpack.c.b16 %v364, %v356
    %v445 = vpack.c.b16 %v365, %v357
    %v446 = vpack.c.b16 %v366, %v358
    %v447 = vpack.c.b16 %v367, %v359
    %v448 = vpack.c.b16 %v368, %v360
    %v449 = vpack.c.b16 %v369, %v361
    %v450 = vpack.c.b16 %v370, %v362
    %v451 = vpack.c.b16 %v379, %v371
    %v452 = vpack.c.b16 %v380, %v372
    %v453 = vpack.c.b16 %v381, %v373
    %v454 = vpack.c.b16 %v382, %v374
    %v455 = vpack.c.b16 %v383, %v375
    %v456 = vpack.c.b16 %v384, %v376
    %v457 = vpack.c.b16 %v385, %v377
    %v458 = vpack.c.b16 %v386, %v378
    %v459 = vpack.c.b16 %v395, %v387
    %v460 = vpack.c.b16 %v396, %v388
    %v461 = vpack.c.b16 %v397, %v389
    %v462 = vpack.c.b16 %v398, %v390
    %v463 = vpack.c.b16 %v399, %v391
    %v464 = vpack.c.b16 %v400, %v392
    %v465 = vpack.c.b16 %v401, %v393
    %v466 = vpack.c.b16 %v402, %v394
    %531 = vmatprep.subr.bf16.mxu0 %v404
    %532 = vmatpush1.bf16.msra.mxu0 %v403
    %533 = vmatprep.subr.bf16.mxu0 %v412
    %534 = vmatpush1.bf16.msra.mxu0 %v411
    %535 = vmatprep.subr.bf16.mxu0 %v420
    %536 = vmatpush1.bf16.msra.mxu0 %v419
    %537 = vmatprep.subr.bf16.mxu0 %v428
    %538 = vmatpush1.bf16.msra.mxu0 %v427
    %539 = vmatprep.subr.bf16.mxu0 %v436
    %540 = vmatpush1.bf16.msra.mxu0 %v435
    %541 = vmatprep.subr.bf16.mxu0 %v444
    %542 = vmatpush1.bf16.msra.mxu0 %v443
    %543 = vmatprep.subr.bf16.mxu0 %v452
    %544 = vmatpush1.bf16.msra.mxu0 %v451
    %545 = vmatprep.subr.bf16.mxu0 %v460
    %546 = vmatpush1.bf16.msra.mxu0 %v459
    %547 = vmatprep.subr.bf16.mxu0 0
    %548 = vmatpush1.bf16.msra.mxu0 0
    %549 = vmatprep.subr.bf16.mxu0 0
    %550 = vmatpush1.bf16.msra.mxu0 0
    %551 = vmatprep.subr.bf16.mxu0 0
    %552 = vmatpush1.bf16.msra.mxu0 0
    %553 = vmatprep.subr.bf16.mxu0 0
    %554 = vmatpush1.bf16.msra.mxu0 0
    %555 = vmatprep.subr.bf16.mxu0 0
    %556 = vmatpush1.bf16.msra.mxu0 0
    %557 = vmatprep.subr.bf16.mxu0 0
    %558 = vmatpush1.bf16.msra.mxu0 0
    %559 = vmatprep.subr.bf16.mxu0 0
    %560 = vmatpush1.bf16.msra.mxu0 0
    %561 = vmatprep.subr.bf16.mxu0 0
    %562 = vmatpush1.bf16.msra.mxu0 0
    %563 = vmatprep.mubr.bf16.mxu0 0
    %564 = vmatmul.mubr.bf16.gmra.mrb[0].mxu0 %v205
    %v565 = vpop.f32.mrb[0].mxu0
    %v566 = vadd.f32 0.0, %v565
    %v567 = vpop.f32.mrb[0].mxu0
    %v568 = vadd.f32 0.0, %v567
    %v569 = vpop.f32.mrb[0].mxu0
    %v570 = vadd.f32 0.0, %v569
    %v571 = vpop.f32.mrb[0].mxu0
    %v572 = vadd.f32 0.0, %v571
    %573 = vmatprep.mubr.bf16.mxu0 0
    %574 = vmatmul.mubr.bf16.gmra.mrb[0].mxu0 %v206
    %v575 = vpop.f32.mrb[0].mxu0
    %v576 = vadd.f32 0.0, %v575
    %v577 = vpop.f32.mrb[0].mxu0
    %v578 = vadd.f32 0.0, %v577
    %v579 = vpop.f32.mrb[0].mxu0
    %v580 = vadd.f32 0.0, %v579
    %v581 = vpop.f32.mrb[0].mxu0
    %v582 = vadd.f32 0.0, %v581
    %583 = vmatprep.mubr.bf16.mxu0 0
    %584 = vmatmul.mubr.bf16.gmra.mrb[0].mxu0 %v207
    %v585 = vpop.f32.mrb[0].mxu0
    %v586 = vadd.f32 0.0, %v585
    %v587 = vpop.f32.mrb[0].mxu0
    %v588 = vadd.f32 0.0, %v587
    %v589 = vpop.f32.mrb[0].mxu0
    %v590 = vpop.f32.mrb[0].mxu0
    %591 = vdwg.mxu0
    %592 = vmatprep.subr.bf16.mxu0 %v406
    %593 = vmatpush1.bf16.msra.mxu0 %v405
    %594 = vmatprep.subr.bf16.mxu0 %v414
    %595 = vmatpush1.bf16.msra.mxu0 %v413
    %596 = vmatprep.subr.bf16.mxu0 %v422
    %597 = vmatpush1.bf16.msra.mxu0 %v421
    %598 = vmatprep.subr.bf16.mxu0 %v430
    %599 = vmatpush1.bf16.msra.mxu0 %v429
    %600 = vmatprep.subr.bf16.mxu0 %v438
    %601 = vmatpush1.bf16.msra.mxu0 %v437
    %602 = vmatprep.subr.bf16.mxu0 %v446
    %603 = vmatpush1.bf16.msra.mxu0 %v445
    %604 = vmatprep.subr.bf16.mxu0 %v454
    %605 = vmatpush1.bf16.msra.mxu0 %v453
    %606 = vmatprep.subr.bf16.mxu0 %v462
    %607 = vmatpush1.bf16.msra.mxu0 %v461
    %608 = vmatprep.subr.bf16.mxu0 0
    %609 = vmatpush1.bf16.msra.mxu0 0
    %610 = vmatprep.subr.bf16.mxu0 0
    %611 = vmatpush1.bf16.msra.mxu0 0
    %612 = vmatprep.subr.bf16.mxu0 0
    %613 = vmatpush1.bf16.msra.mxu0 0
    %614 = vmatprep.subr.bf16.mxu0 0
    %615 = vmatpush1.bf16.msra.mxu0 0
    %616 = vmatprep.subr.bf16.mxu0 0
    %617 = vmatpush1.bf16.msra.mxu0 0
    %618 = vmatprep.subr.bf16.mxu0 0
    %619 = vmatpush1.bf16.msra.mxu0 0
    %620 = vmatprep.subr.bf16.mxu0 0
    %621 = vmatpush1.bf16.msra.mxu0 0
    %622 = vmatprep.subr.bf16.mxu0 0
    %623 = vmatpush1.bf16.msra.mxu0 0
    %624 = vmatprep.mubr.bf16.mxu0 0
    %625 = vmatmul.mubr.bf16.gmra.mrb[0].mxu0 %v205
    %v626 = vpop.f32.mrb[0].mxu0
    %v627 = vadd.f32 0.0, %v626
    %v628 = vpop.f32.mrb[0].mxu0
    %v629 = vadd.f32 0.0, %v628
    %v630 = vpop.f32.mrb[0].mxu0
    %v631 = vadd.f32 0.0, %v630
    %v632 = vpop.f32.mrb[0].mxu0
    %v633 = vadd.f32 0.0, %v632
    %634 = vmatprep.mubr.bf16.mxu0 0
    %635 = vmatmul.mubr.bf16.gmra.mrb[0].mxu0 %v206
    %v636 = vpop.f32.mrb[0].mxu0
    %v637 = vadd.f32 0.0, %v636
    %v638 = vpop.f32.mrb[0].mxu0
    %v639 = vadd.f32 0.0, %v638
    %v640 = vpop.f32.mrb[0].mxu0
    %v641 = vadd.f32 0.0, %v640
    %v642 = vpop.f32.mrb[0].mxu0
    %v643 = vadd.f32 0.0, %v642
    %644 = vmatprep.mubr.bf16.mxu0 0
    %645 = vmatmul.mubr.bf16.gmra.mrb[0].mxu0 %v207
    %v646 = vpop.f32.mrb[0].mxu0
    %v647 = vadd.f32 0.0, %v646
    %v648 = vpop.f32.mrb[0].mxu0
    %v649 = vadd.f32 0.0, %v648
    %v650 = vpop.f32.mrb[0].mxu0
    %v651 = vpop.f32.mrb[0].mxu0
    %652 = vdwg.mxu0
    %653 = vmatprep.subr.bf16.mxu0 %v408
    %654 = vmatpush1.bf16.msra.mxu0 %v407
    %655 = vmatprep.subr.bf16.mxu0 %v416
    %656 = vmatpush1.bf16.msra.mxu0 %v415
    %657 = vmatprep.subr.bf16.mxu0 %v424
    %658 = vmatpush1.bf16.msra.mxu0 %v423
    %659 = vmatprep.subr.bf16.mxu0 %v432
    %660 = vmatpush1.bf16.msra.mxu0 %v431
    %661 = vmatprep.subr.bf16.mxu0 %v440
    %662 = vmatpush1.bf16.msra.mxu0 %v439
    %663 = vmatprep.subr.bf16.mxu0 %v448
    %664 = vmatpush1.bf16.msra.mxu0 %v447
    %665 = vmatprep.subr.bf16.mxu0 %v456
    %666 = vmatpush1.bf16.msra.mxu0 %v455
    %667 = vmatprep.subr.bf16.mxu0 %v464
    %668 = vmatpush1.bf16.msra.mxu0 %v463
    %669 = vmatprep.subr.bf16.mxu0 0
    %670 = vmatpush1.bf16.msra.mxu0 0
    %671 = vmatprep.subr.bf16.mxu0 0
    %672 = vmatpush1.bf16.msra.mxu0 0
    %673 = vmatprep.subr.bf16.mxu0 0
    %674 = vmatpush1.bf16.msra.mxu0 0
    %675 = vmatprep.subr.bf16.mxu0 0
    %676 = vmatpush1.bf16.msra.mxu0 0
    %677 = vmatprep.subr.bf16.mxu0 0
    %678 = vmatpush1.bf16.msra.mxu0 0
    %679 = vmatprep.subr.bf16.mxu0 0
    %680 = vmatpush1.bf16.msra.mxu0 0
    %681 = vmatprep.subr.bf16.mxu0 0
    %682 = vmatpush1.bf16.msra.mxu0 0
    %683 = vmatprep.subr.bf16.mxu0 0
    %684 = vmatpush1.bf16.msra.mxu0 0
    %685 = vmatprep.mubr.bf16.mxu0 0
    %686 = vmatmul.mubr.bf16.gmra.mrb[0].mxu0 %v205
    %v687 = vpop.f32.mrb[0].mxu0
    %v688 = vadd.f32 0.0, %v687
    %v689 = vpop.f32.mrb[0].mxu0
    %v690 = vadd.f32 0.0, %v689
    %v691 = vpop.f32.mrb[0].mxu0
    %v692 = vadd.f32 0.0, %v691
    %v693 = vpop.f32.mrb[0].mxu0
    %v694 = vadd.f32 0.0, %v693
    %695 = vmatprep.mubr.bf16.mxu0 0
    %696 = vmatmul.mubr.bf16.gmra.mrb[0].mxu0 %v206
    %v697 = vpop.f32.mrb[0].mxu0
    %v698 = vadd.f32 0.0, %v697
    %v699 = vpop.f32.mrb[0].mxu0
    %v700 = vadd.f32 0.0, %v699
    %v701 = vpop.f32.mrb[0].mxu0
    %v702 = vadd.f32 0.0, %v701
    %v703 = vpop.f32.mrb[0].mxu0
    %v704 = vadd.f32 0.0, %v703
    %705 = vmatprep.mubr.bf16.mxu0 0
    %706 = vmatmul.mubr.bf16.gmra.mrb[0].mxu0 %v207
    %v707 = vpop.f32.mrb[0].mxu0
    %v708 = vadd.f32 0.0, %v707
    %v709 = vpop.f32.mrb[0].mxu0
    %v710 = vadd.f32 0.0, %v709
    %v711 = vpop.f32.mrb[0].mxu0
    %v712 = vpop.f32.mrb[0].mxu0
    %713 = vdwg.mxu0
    %714 = vmatprep.subr.bf16.mxu0 %v410
    %715 = vmatpush1.bf16.msra.mxu0 %v409
    %716 = vmatprep.subr.bf16.mxu0 %v418
    %717 = vmatpush1.bf16.msra.mxu0 %v417
    %718 = vmatprep.subr.bf16.mxu0 %v426
    %719 = vmatpush1.bf16.msra.mxu0 %v425
    %720 = vmatprep.subr.bf16.mxu0 %v434
    %721 = vmatpush1.bf16.msra.mxu0 %v433
    %722 = vmatprep.subr.bf16.mxu0 %v442
    %723 = vmatpush1.bf16.msra.mxu0 %v441
    %724 = vmatprep.subr.bf16.mxu0 %v450
    %725 = vmatpush1.bf16.msra.mxu0 %v449
    %726 = vmatprep.subr.bf16.mxu0 %v458
    %727 = vmatpush1.bf16.msra.mxu0 %v457
    %728 = vmatprep.subr.bf16.mxu0 %v466
    %729 = vmatpush1.bf16.msra.mxu0 %v465
    %730 = vmatprep.subr.bf16.mxu0 0
    %731 = vmatpush1.bf16.msra.mxu0 0
    %732 = vmatprep.subr.bf16.mxu0 0
    %733 = vmatpush1.bf16.msra.mxu0 0
    %734 = vmatprep.subr.bf16.mxu0 0
    %735 = vmatpush1.bf16.msra.mxu0 0
    %736 = vmatprep.subr.bf16.mxu0 0
    %737 = vmatpush1.bf16.msra.mxu0 0
    %738 = vmatprep.subr.bf16.mxu0 0
    %739 = vmatpush1.bf16.msra.mxu0 0
    %740 = vmatprep.subr.bf16.mxu0 0
    %741 = vmatpush1.bf16.msra.mxu0 0
    %742 = vmatprep.subr.bf16.mxu0 0
    %743 = vmatpush1.bf16.msra.mxu0 0
    %744 = vmatprep.subr.bf16.mxu0 0
    %745 = vmatpush1.bf16.msra.mxu0 0
    %746 = vmatprep.mubr.bf16.mxu0 0
    %747 = vmatmul.mubr.bf16.gmra.mrb[0].mxu0 %v205
    %v748 = vpop.f32.mrb[0].mxu0
    %v749 = vadd.f32 0.0, %v748
    %v750 = vpop.f32.mrb[0].mxu0
    %v751 = vadd.f32 0.0, %v750
    %v752 = vpop.f32.mrb[0].mxu0
    %v753 = vadd.f32 0.0, %v752
    %v754 = vpop.f32.mrb[0].mxu0
    %v755 = vadd.f32 0.0, %v754
    %756 = vmatprep.mubr.bf16.mxu0 0
    %757 = vmatmul.mubr.bf16.gmra.mrb[0].mxu0 %v206
    %v758 = vpop.f32.mrb[0].mxu0
    %v759 = vadd.f32 0.0, %v758
    %v760 = vpop.f32.mrb[0].mxu0
    %v761 = vadd.f32 0.0, %v760
    %v762 = vpop.f32.mrb[0].mxu0
    %v763 = vadd.f32 0.0, %v762
    %v764 = vpop.f32.mrb[0].mxu0
    %v765 = vadd.f32 0.0, %v764
    %766 = vmatprep.mubr.bf16.mxu0 0
    %767 = vmatmul.mubr.bf16.gmra.mrb[0].mxu0 %v207
    %v768 = vpop.f32.mrb[0].mxu0
    %v769 = vadd.f32 0.0, %v768
    %v770 = vpop.f32.mrb[0].mxu0
    %v771 = vadd.f32 0.0, %v770
    %v772 = vpop.f32.mrb[0].mxu0
    %v773 = vpop.f32.mrb[0].mxu0
    %774 = vdwg.mxu0
    %v775 = vunpack.c.l.bf16 %v126
    %v776 = vunpack.c.l.bf16 %v127
    %v777 = vunpack.c.l.bf16 %v128
    %v778 = vunpack.c.l.bf16 %v129
    %v779 = vunpack.c.l.bf16 %v130
    %v780 = vmul.f32 %v566, %v775
    %v781 = vmul.f32 %v568, %v775
    %v782 = vmul.f32 %v627, %v775
    %v783 = vmul.f32 %v629, %v775
    %v784 = vmul.f32 %v688, %v775
    %v785 = vmul.f32 %v690, %v775
    %v786 = vmul.f32 %v749, %v775
    %v787 = vmul.f32 %v751, %v775
    %v788 = vmul.f32 %v570, %v776
    %v789 = vmul.f32 %v572, %v776
    %v790 = vmul.f32 %v631, %v776
    %v791 = vmul.f32 %v633, %v776
    %v792 = vmul.f32 %v692, %v776
    %v793 = vmul.f32 %v694, %v776
    %v794 = vmul.f32 %v753, %v776
    %v795 = vmul.f32 %v755, %v776
    %v796 = vmul.f32 %v576, %v777
    %v797 = vmul.f32 %v578, %v777
    %v798 = vmul.f32 %v637, %v777
    %v799 = vmul.f32 %v639, %v777
    %v800 = vmul.f32 %v698, %v777
    %v801 = vmul.f32 %v700, %v777
    %v802 = vmul.f32 %v759, %v777
    %v803 = vmul.f32 %v761, %v777
    %v804 = vmul.f32 %v580, %v778
    %v805 = vmul.f32 %v582, %v778
    %v806 = vmul.f32 %v641, %v778
    %v807 = vmul.f32 %v643, %v778
    %v808 = vmul.f32 %v702, %v778
    %v809 = vmul.f32 %v704, %v778
    %v810 = vmul.f32 %v763, %v778
    %v811 = vmul.f32 %v765, %v778
    %v812 = vmul.f32 %v586, %v779
    %v813 = vmul.f32 %v588, %v779
    %v814 = vmul.f32 %v647, %v779
    %v815 = vmul.f32 %v649, %v779
    %v816 = vmul.f32 %v708, %v779
    %v817 = vmul.f32 %v710, %v779
    %v818 = vmul.f32 %v769, %v779
    %v819 = vmul.f32 %v771, %v779
    %v820 = vld [vmem:[#allocation8] sm:$0xff]
    %v821 = vld [vmem:[#allocation8 + $0x8] sm:$0xff]
    %v822 = vld [vmem:[#allocation8 + $0x10] sm:$0xff]
    %v823 = vld [vmem:[#allocation8 + $0x18] sm:$0xff]
    %v824 = vld [vmem:[#allocation8 + $0x20] sm:$0xff]
    %v825 = vld [vmem:[#allocation8 + $0x28] sm:$0xff]
    %v826 = vld [vmem:[#allocation8 + $0x30] sm:$0xff]
    %v827 = vld [vmem:[#allocation8 + $0x38] sm:$0xff]
    %v828 = vld [vmem:[#allocation8 + $0x40] sm:$0xff]
    %v829 = vld [vmem:[#allocation8 + $0x48] sm:$0xff]
    %v830 = vld [vmem:[#allocation8 + $0x50] sm:$0xff]
    %v831 = vld [vmem:[#allocation8 + $0x58] sm:$0xff]
    %v832 = vld [vmem:[#allocation8 + $0x60] sm:$0xff]
    %v833 = vld [vmem:[#allocation8 + $0x68] sm:$0xff]
    %v834 = vld [vmem:[#allocation8 + $0x70] sm:$0xff]
    %v835 = vld [vmem:[#allocation8 + $0x78] sm:$0xff]
    %v836 = vld [vmem:[#allocation8 + $0x80] sm:$0xff]
    %v837 = vld [vmem:[#allocation8 + $0x88] sm:$0xff]
    %v838 = vld [vmem:[#allocation8 + $0x90] sm:$0xff]
    %v839 = vld [vmem:[#allocation8 + $0x98] sm:$0xff]
    %v840 = vld [vmem:[#allocation8 + $0xa0] sm:$0xff]
    %v841 = vld [vmem:[#allocation8 + $0xa8] sm:$0xff]
    %v842 = vld [vmem:[#allocation8 + $0xb0] sm:$0xff]
    %v843 = vld [vmem:[#allocation8 + $0xb8] sm:$0xff]
    %v844 = vld [vmem:[#allocation8 + $0xc0] sm:$0xff]
    %v845 = vld [vmem:[#allocation8 + $0xc8] sm:$0xff]
    %v846 = vld [vmem:[#allocation8 + $0xd0] sm:$0xff]
    %v847 = vld [vmem:[#allocation8 + $0xd8] sm:$0xff]
    %v848 = vld [vmem:[#allocation8 + $0xe0] sm:$0xff]
    %v849 = vld [vmem:[#allocation8 + $0xe8] sm:$0xff]
    %v850 = vld [vmem:[#allocation8 + $0xf0] sm:$0xff]
    %v851 = vld [vmem:[#allocation8 + $0xf8] sm:$0xff]
    %v852 = vld [vmem:[#allocation8 + $0x100] sm:$0xff]
    %v853 = vld [vmem:[#allocation8 + $0x108] sm:$0xff]
    %v854 = vld [vmem:[#allocation8 + $0x110] sm:$0xff]
    %v855 = vld [vmem:[#allocation8 + $0x118] sm:$0xff]
    %v856 = vld [vmem:[#allocation8 + $0x120] sm:$0xff]
    %v857 = vld [vmem:[#allocation8 + $0x128] sm:$0xff]
    %v858 = vld [vmem:[#allocation8 + $0x130] sm:$0xff]
    %v859 = vld [vmem:[#allocation8 + $0x138] sm:$0xff]
    %v860 = vld [vmem:[#allocation8 + $0x140] sm:$0xff]
    %v861 = vld [vmem:[#allocation8 + $0x148] sm:$0xff]
    %v862 = vld [vmem:[#allocation8 + $0x150] sm:$0xff]
    %v863 = vld [vmem:[#allocation8 + $0x158] sm:$0xff]
    %v864 = vld [vmem:[#allocation8 + $0x160] sm:$0xff]
    %v865 = vld [vmem:[#allocation8 + $0x168] sm:$0xff]
    %v866 = vld [vmem:[#allocation8 + $0x170] sm:$0xff]
    %v867 = vld [vmem:[#allocation8 + $0x178] sm:$0xff]
    %v868 = vld [vmem:[#allocation8 + $0x180] sm:$0xff]
    %v869 = vld [vmem:[#allocation8 + $0x188] sm:$0xff]
    %v870 = vld [vmem:[#allocation8 + $0x190] sm:$0xff]
    %v871 = vld [vmem:[#allocation8 + $0x198] sm:$0xff]
    %v872 = vld [vmem:[#allocation8 + $0x1a0] sm:$0xff]
    %v873 = vld [vmem:[#allocation8 + $0x1a8] sm:$0xff]
    %v874 = vld [vmem:[#allocation8 + $0x1b0] sm:$0xff]
    %v875 = vld [vmem:[#allocation8 + $0x1b8] sm:$0xff]
    %v876 = vld [vmem:[#allocation8 + $0x1c0] sm:$0xff]
    %v877 = vld [vmem:[#allocation8 + $0x1c8] sm:$0xff]
    %v878 = vld [vmem:[#allocation8 + $0x1d0] sm:$0xff]
    %v879 = vld [vmem:[#allocation8 + $0x1d8] sm:$0xff]
    %v880 = vld [vmem:[#allocation8 + $0x1e0] sm:$0xff]
    %v881 = vld [vmem:[#allocation8 + $0x1e8] sm:$0xff]
    %v882 = vld [vmem:[#allocation8 + $0x1f0] sm:$0xff]
    %v883 = vld [vmem:[#allocation8 + $0x1f8] sm:$0xff]
    %v884 = vld [vmem:[#allocation8 + $0x200] sm:$0xff]
    %v885 = vld [vmem:[#allocation8 + $0x208] sm:$0xff]
    %v886 = vld [vmem:[#allocation8 + $0x210] sm:$0xff]
    %v887 = vld [vmem:[#allocation8 + $0x218] sm:$0xff]
    %v888 = vld [vmem:[#allocation8 + $0x220] sm:$0xff]
    %v889 = vld [vmem:[#allocation8 + $0x228] sm:$0xff]
    %v890 = vld [vmem:[#allocation8 + $0x230] sm:$0xff]
    %v891 = vld [vmem:[#allocation8 + $0x238] sm:$0xff]
    %v892 = vld [vmem:[#allocation8 + $0x240] sm:$0xff]
    %v893 = vld [vmem:[#allocation8 + $0x248] sm:$0xff]
    %v894 = vld [vmem:[#allocation8 + $0x250] sm:$0xff]
    %v895 = vld [vmem:[#allocation8 + $0x258] sm:$0xff]
    %v896 = vld [vmem:[#allocation8 + $0x260] sm:$0xff]
    %v897 = vld [vmem:[#allocation8 + $0x268] sm:$0xff]
    %v898 = vld [vmem:[#allocation8 + $0x270] sm:$0xff]
    %v899 = vld [vmem:[#allocation8 + $0x278] sm:$0xff]
    %v900 = vld [vmem:[#allocation8 + $0x280] sm:$0xff]
    %v901 = vld [vmem:[#allocation8 + $0x288] sm:$0xff]
    %v902 = vld [vmem:[#allocation8 + $0x290] sm:$0xff]
    %v903 = vld [vmem:[#allocation8 + $0x298] sm:$0xff]
    %v904 = vld [vmem:[#allocation8 + $0x2a0] sm:$0xff]
    %v905 = vld [vmem:[#allocation8 + $0x2a8] sm:$0xff]
    %v906 = vld [vmem:[#allocation8 + $0x2b0] sm:$0xff]
    %v907 = vld [vmem:[#allocation8 + $0x2b8] sm:$0xff]
    %v908 = vld [vmem:[#allocation8 + $0x2c0] sm:$0xff]
    %v909 = vld [vmem:[#allocation8 + $0x2c8] sm:$0xff]
    %v910 = vld [vmem:[#allocation8 + $0x2d0] sm:$0xff]
    %v911 = vld [vmem:[#allocation8 + $0x2d8] sm:$0xff]
    %v912 = vld [vmem:[#allocation8 + $0x2e0] sm:$0xff]
    %v913 = vld [vmem:[#allocation8 + $0x2e8] sm:$0xff]
    %v914 = vld [vmem:[#allocation8 + $0x2f0] sm:$0xff]
    %v915 = vld [vmem:[#allocation8 + $0x2f8] sm:$0xff]
    %v916 = vld [vmem:[#allocation8 + $0x300] sm:$0xff]
    %v917 = vld [vmem:[#allocation8 + $0x308] sm:$0xff]
    %v918 = vld [vmem:[#allocation8 + $0x310] sm:$0xff]
    %v919 = vld [vmem:[#allocation8 + $0x318] sm:$0xff]
    %v920 = vld [vmem:[#allocation8 + $0x320] sm:$0xff]
    %v921 = vld [vmem:[#allocation8 + $0x328] sm:$0xff]
    %v922 = vld [vmem:[#allocation8 + $0x330] sm:$0xff]
    %v923 = vld [vmem:[#allocation8 + $0x338] sm:$0xff]
    %v924 = vld [vmem:[#allocation8 + $0x340] sm:$0xff]
    %v925 = vld [vmem:[#allocation8 + $0x348] sm:$0xff]
    %v926 = vld [vmem:[#allocation8 + $0x350] sm:$0xff]
    %v927 = vld [vmem:[#allocation8 + $0x358] sm:$0xff]
    %v928 = vld [vmem:[#allocation8 + $0x360] sm:$0xff]
    %v929 = vld [vmem:[#allocation8 + $0x368] sm:$0xff]
    %v930 = vld [vmem:[#allocation8 + $0x370] sm:$0xff]
    %v931 = vld [vmem:[#allocation8 + $0x378] sm:$0xff]
    %v932 = vld [vmem:[#allocation8 + $0x380] sm:$0xff]
    %v933 = vld [vmem:[#allocation8 + $0x388] sm:$0xff]
    %v934 = vld [vmem:[#allocation8 + $0x390] sm:$0xff]
    %v935 = vld [vmem:[#allocation8 + $0x398] sm:$0xff]
    %v936 = vld [vmem:[#allocation8 + $0x3a0] sm:$0xff]
    %v937 = vld [vmem:[#allocation8 + $0x3a8] sm:$0xff]
    %v938 = vld [vmem:[#allocation8 + $0x3b0] sm:$0xff]
    %v939 = vld [vmem:[#allocation8 + $0x3b8] sm:$0xff]
    %v940 = vld [vmem:[#allocation8 + $0x3c0] sm:$0xff]
    %v941 = vld [vmem:[#allocation8 + $0x3c8] sm:$0xff]
    %v942 = vld [vmem:[#allocation8 + $0x3d0] sm:$0xff]
    %v943 = vld [vmem:[#allocation8 + $0x3d8] sm:$0xff]
    %v944 = vld [vmem:[#allocation8 + $0x3e0] sm:$0xff]
    %v945 = vld [vmem:[#allocation8 + $0x3e8] sm:$0xff]
    %v946 = vld [vmem:[#allocation8 + $0x3f0] sm:$0xff]
    %v947 = vld [vmem:[#allocation8 + $0x3f8] sm:$0xff]
    %v948 = vld [vmem:[#allocation10] sm:$0xf]
    %v949 = vld [vmem:[#allocation10 + $0x4] sm:$0xf]
    %v950 = vld [vmem:[#allocation10 + $0x8] sm:$0xf]
    %v951 = vld [vmem:[#allocation10 + $0xc] sm:$0xf]
    %v952 = vld [vmem:[#allocation10 + $0x10] sm:$0xf]
    %v953 = vld [vmem:[#allocation10 + $0x14] sm:$0xf]
    %v954 = vld [vmem:[#allocation10 + $0x18] sm:$0xf]
    %v955 = vld [vmem:[#allocation10 + $0x1c] sm:$0xf]
    %v956 = vld [vmem:[#allocation10 + $0x20] sm:$0xf]
    %v957 = vld [vmem:[#allocation10 + $0x24] sm:$0xf]
    %v958 = vld [vmem:[#allocation10 + $0x28] sm:$0xf]
    %v959 = vld [vmem:[#allocation10 + $0x2c] sm:$0xf]
    %v960 = vld [vmem:[#allocation10 + $0x30] sm:$0xf]
    %v961 = vld [vmem:[#allocation10 + $0x34] sm:$0xf]
    %v962 = vld [vmem:[#allocation10 + $0x38] sm:$0xf]
    %v963 = vld [vmem:[#allocation10 + $0x3c] sm:$0xf]
    %v964 = vld [vmem:[#allocation11] sm:$0xf]
    %v965 = vld [vmem:[#allocation11 + $0x4] sm:$0xf]
    %v966 = vld [vmem:[#allocation11 + $0x8] sm:$0xf]
    %v967 = vld [vmem:[#allocation11 + $0xc] sm:$0xf]
    %v968 = vld [vmem:[#allocation11 + $0x10] sm:$0xf]
    %v969 = vld [vmem:[#allocation11 + $0x14] sm:$0xf]
    %v970 = vld [vmem:[#allocation11 + $0x18] sm:$0xf]
    %v971 = vld [vmem:[#allocation11 + $0x1c] sm:$0xf]
    %v972 = vld [vmem:[#allocation11 + $0x20] sm:$0xf]
    %v973 = vld [vmem:[#allocation11 + $0x24] sm:$0xf]
    %v974 = vld [vmem:[#allocation11 + $0x28] sm:$0xf]
    %v975 = vld [vmem:[#allocation11 + $0x2c] sm:$0xf]
    %v976 = vld [vmem:[#allocation11 + $0x30] sm:$0xf]
    %v977 = vld [vmem:[#allocation11 + $0x34] sm:$0xf]
    %v978 = vld [vmem:[#allocation11 + $0x38] sm:$0xf]
    %v979 = vld [vmem:[#allocation11 + $0x3c] sm:$0xf]
    %v985 = vunpack.c.l.b16 %v126
    %v986 = vunpack.c.l.b16 %v127
    %v987 = vunpack.c.l.b16 %v128
    %v988 = vunpack.c.l.b16 %v129
    %v989 = vunpack.c.l.b16 %v130
    %v990 = vpack.c.b16 %v986, %v985
    %v991 = vpack.c.b16 %v988, %v987
    %v992 = vpack.c.b16 %v989, %v989
    %v1012 = vunpack.c.l.b16 %v964
    %v1013 = vunpack.c.l.b16 %v965
    %v1014 = vunpack.c.l.b16 %v966
    %v1015 = vunpack.c.l.b16 %v967
    %v1016 = vunpack.c.l.b16 %v968
    %v1017 = vunpack.c.l.b16 %v969
    %v1018 = vunpack.c.l.b16 %v970
    %v1019 = vunpack.c.l.b16 %v971
    %v1020 = vunpack.c.l.b16 %v972
    %v1021 = vunpack.c.l.b16 %v973
    %v1022 = vunpack.c.l.b16 %v974
    %v1023 = vunpack.c.l.b16 %v975
    %v1024 = vunpack.c.l.b16 %v976
    %v1025 = vunpack.c.l.b16 %v977
    %v1026 = vunpack.c.l.b16 %v978
    %v1027 = vunpack.c.l.b16 %v979
    %v1028 = vpack.c.b16 %v1013, %v1012
    %v1029 = vpack.c.b16 %v1015, %v1014
    %v1030 = vpack.c.b16 %v1017, %v1016
    %v1031 = vpack.c.b16 %v1019, %v1018
    %v1032 = vpack.c.b16 %v1021, %v1020
    %v1033 = vpack.c.b16 %v1023, %v1022
    %v1034 = vpack.c.b16 %v1025, %v1024
    %v1035 = vpack.c.b16 %v1027, %v1026
    %1044 = vmatprep.subr.bf16.mxu0 0
    %1045 = vmatpush1.bf16.msra.mxu0 %v1028
    %1046 = vmatprep.subr.bf16.mxu0 0
    %1047 = vmatpush1.bf16.msra.mxu0 %v1029
    %1048 = vmatprep.subr.bf16.mxu0 0
    %1049 = vmatpush1.bf16.msra.mxu0 %v1030
    %1050 = vmatprep.subr.bf16.mxu0 0
    %1051 = vmatpush1.bf16.msra.mxu0 %v1031
    %1052 = vmatprep.subr.bf16.mxu0 0
    %1053 = vmatpush1.bf16.msra.mxu0 %v1032
    %1054 = vmatprep.subr.bf16.mxu0 0
    %1055 = vmatpush1.bf16.msra.mxu0 %v1033
    %1056 = vmatprep.subr.bf16.mxu0 0
    %1057 = vmatpush1.bf16.msra.mxu0 %v1034
    %1058 = vmatprep.subr.bf16.mxu0 0
    %1059 = vmatpush1.bf16.msra.mxu0 %v1035
    %1060 = vmatprep.subr.bf16.mxu0 0
    %1061 = vmatpush1.bf16.msra.mxu0 0
    %1062 = vmatprep.subr.bf16.mxu0 0
    %1063 = vmatpush1.bf16.msra.mxu0 0
    %1064 = vmatprep.subr.bf16.mxu0 0
    %1065 = vmatpush1.bf16.msra.mxu0 0
    %1066 = vmatprep.subr.bf16.mxu0 0
    %1067 = vmatpush1.bf16.msra.mxu0 0
    %1068 = vmatprep.subr.bf16.mxu0 0
    %1069 = vmatpush1.bf16.msra.mxu0 0
    %1070 = vmatprep.subr.bf16.mxu0 0
    %1071 = vmatpush1.bf16.msra.mxu0 0
    %1072 = vmatprep.subr.bf16.mxu0 0
    %1073 = vmatpush1.bf16.msra.mxu0 0
    %1074 = vmatprep.subr.bf16.mxu0 0
    %1075 = vmatpush1.bf16.msra.mxu0 0
    %1076 = vmatprep.mubr.bf16.mxu0 0
    %1077 = vmatmul.mubr.bf16.gmra.mrb[0].mxu0 %v990
    %v1078 = vpop.f32.mrb[0].mxu0
    %v1079 = vadd.f32 0.0, %v1078
    %v1080 = vpop.f32.mrb[0].mxu0
    %v1081 = vpop.f32.mrb[0].mxu0
    %v1082 = vadd.f32 0.0, %v1081
    %v1083 = vpop.f32.mrb[0].mxu0
    %1084 = vmatprep.mubr.bf16.mxu0 0
    %1085 = vmatmul.mubr.bf16.gmra.mrb[0].mxu0 %v991
    %v1086 = vpop.f32.mrb[0].mxu0
    %v1087 = vadd.f32 0.0, %v1086
    %v1088 = vpop.f32.mrb[0].mxu0
    %v1089 = vpop.f32.mrb[0].mxu0
    %v1090 = vadd.f32 0.0, %v1089
    %v1091 = vpop.f32.mrb[0].mxu0
    %1092 = vmatprep.mubr.bf16.mxu0 0
    %1093 = vmatmul.mubr.bf16.gmra.mrb[0].mxu0 %v992
    %v1094 = vpop.f32.mrb[0].mxu0
    %v1095 = vadd.f32 0.0, %v1094
    %v1096 = vpop.f32.mrb[0].mxu0
    %v1097 = vpop.f32.mrb[0].mxu0
    %v1098 = vpop.f32.mrb[0].mxu0
    %1099 = vdwg.mxu0
    %v1116 = vunpack.c.l.b16 %v948
    %v1117 = vunpack.c.l.b16 %v949
    %v1118 = vunpack.c.l.b16 %v950
    %v1119 = vunpack.c.l.b16 %v951
    %v1120 = vunpack.c.l.b16 %v952
    %v1121 = vunpack.c.l.b16 %v953
    %v1122 = vunpack.c.l.b16 %v954
    %v1123 = vunpack.c.l.b16 %v955
    %v1124 = vunpack.c.l.b16 %v956
    %v1125 = vunpack.c.l.b16 %v957
    %v1126 = vunpack.c.l.b16 %v958
    %v1127 = vunpack.c.l.b16 %v959
    %v1128 = vunpack.c.l.b16 %v960
    %v1129 = vunpack.c.l.b16 %v961
    %v1130 = vunpack.c.l.b16 %v962
    %v1131 = vunpack.c.l.b16 %v963
    %v1132 = vpack.c.b16 %v1117, %v1116
    %v1133 = vpack.c.b16 %v1119, %v1118
    %v1134 = vpack.c.b16 %v1121, %v1120
    %v1135 = vpack.c.b16 %v1123, %v1122
    %v1136 = vpack.c.b16 %v1125, %v1124
    %v1137 = vpack.c.b16 %v1127, %v1126
    %v1138 = vpack.c.b16 %v1129, %v1128
    %v1139 = vpack.c.b16 %v1131, %v1130
    %1148 = vmatprep.subr.bf16.mxu0 0
    %1149 = vmatpush1.bf16.msra.mxu0 %v1132
    %1150 = vmatprep.subr.bf16.mxu0 0
    %1151 = vmatpush1.bf16.msra.mxu0 %v1133
    %1152 = vmatprep.subr.bf16.mxu0 0
    %1153 = vmatpush1.bf16.msra.mxu0 %v1134
    %1154 = vmatprep.subr.bf16.mxu0 0
    %1155 = vmatpush1.bf16.msra.mxu0 %v1135
    %1156 = vmatprep.subr.bf16.mxu0 0
    %1157 = vmatpush1.bf16.msra.mxu0 %v1136
    %1158 = vmatprep.subr.bf16.mxu0 0
    %1159 = vmatpush1.bf16.msra.mxu0 %v1137
    %1160 = vmatprep.subr.bf16.mxu0 0
    %1161 = vmatpush1.bf16.msra.mxu0 %v1138
    %1162 = vmatprep.subr.bf16.mxu0 0
    %1163 = vmatpush1.bf16.msra.mxu0 %v1139
    %1164 = vmatprep.subr.bf16.mxu0 0
    %1165 = vmatpush1.bf16.msra.mxu0 0
    %1166 = vmatprep.subr.bf16.mxu0 0
    %1167 = vmatpush1.bf16.msra.mxu0 0
    %1168 = vmatprep.subr.bf16.mxu0 0
    %1169 = vmatpush1.bf16.msra.mxu0 0
    %1170 = vmatprep.subr.bf16.mxu0 0
    %1171 = vmatpush1.bf16.msra.mxu0 0
    %1172 = vmatprep.subr.bf16.mxu0 0
    %1173 = vmatpush1.bf16.msra.mxu0 0
    %1174 = vmatprep.subr.bf16.mxu0 0
    %1175 = vmatpush1.bf16.msra.mxu0 0
    %1176 = vmatprep.subr.bf16.mxu0 0
    %1177 = vmatpush1.bf16.msra.mxu0 0
    %1178 = vmatprep.subr.bf16.mxu0 0
    %1179 = vmatpush1.bf16.msra.mxu0 0
    %1180 = vmatprep.mubr.bf16.mxu0 0
    %1181 = vmatmul.mubr.bf16.gmra.mrb[0].mxu0 %v205
    %v1182 = vpop.f32.mrb[0].mxu0
    %v1183 = vadd.f32 %v1079, %v1182
    %v1184 = vpop.f32.mrb[0].mxu0
    %v1185 = vpop.f32.mrb[0].mxu0
    %v1186 = vadd.f32 %v1082, %v1185
    %v1187 = vpop.f32.mrb[0].mxu0
    %1188 = vmatprep.mubr.bf16.mxu0 0
    %1189 = vmatmul.mubr.bf16.gmra.mrb[0].mxu0 %v206
    %v1190 = vpop.f32.mrb[0].mxu0
    %v1191 = vadd.f32 %v1087, %v1190
    %v1192 = vpop.f32.mrb[0].mxu0
    %v1193 = vpop.f32.mrb[0].mxu0
    %v1194 = vadd.f32 %v1090, %v1193
    %v1195 = vpop.f32.mrb[0].mxu0
    %1196 = vmatprep.mubr.bf16.mxu0 0
    %1197 = vmatmul.mubr.bf16.gmra.mrb[0].mxu0 %v207
    %v1198 = vpop.f32.mrb[0].mxu0
    %v1199 = vadd.f32 %v1095, %v1198
    %v1200 = vpop.f32.mrb[0].mxu0
    %v1201 = vpop.f32.mrb[0].mxu0
    %v1202 = vpop.f32.mrb[0].mxu0
    %1203 = vdwg.mxu0
    %1204 = vmatprep.subr.mxu0 0.0
    %1205 = vmatpush1.msra.mxu0 %v820
    %1206 = vmatprep.subr.mxu0 0.0
    %1207 = vmatpush1.msra.mxu0 %v821
    %1208 = vmatprep.subr.mxu0 0.0
    %1209 = vmatpush1.msra.mxu0 %v822
    %1210 = vmatprep.subr.mxu0 0.0
    %1211 = vmatpush1.msra.mxu0 %v823
    %1212 = vmatprep.subr.mxu0 0.0
    %1213 = vmatpush1.msra.mxu0 %v824
    %1214 = vmatprep.subr.mxu0 0.0
    %1215 = vmatpush1.msra.mxu0 %v825
    %1216 = vmatprep.subr.mxu0 0.0
    %1217 = vmatpush1.msra.mxu0 %v826
    %1218 = vmatprep.subr.mxu0 0.0
    %1219 = vmatpush1.msra.mxu0 %v827
    %1220 = vmatprep.subr.mxu0 0.0
    %1221 = vmatpush1.msra.mxu0 %v828
    %1222 = vmatprep.subr.mxu0 0.0
    %1223 = vmatpush1.msra.mxu0 %v829
    %1224 = vmatprep.subr.mxu0 0.0
    %1225 = vmatpush1.msra.mxu0 %v830
    %1226 = vmatprep.subr.mxu0 0.0
    %1227 = vmatpush1.msra.mxu0 %v831
    %1228 = vmatprep.subr.mxu0 0.0
    %1229 = vmatpush1.msra.mxu0 %v832
    %1230 = vmatprep.subr.mxu0 0.0
    %1231 = vmatpush1.msra.mxu0 %v833
    %1232 = vmatprep.subr.mxu0 0.0
    %1233 = vmatpush1.msra.mxu0 %v834
    %1234 = vmatprep.subr.mxu0 0.0
    %1235 = vmatpush1.msra.mxu0 %v835
    %1236 = vmatprep.subr.mxu0 0.0
    %1237 = vmatpush1.msra.mxu0 %v836
    %1238 = vmatprep.subr.mxu0 0.0
    %1239 = vmatpush1.msra.mxu0 %v837
    %1240 = vmatprep.subr.mxu0 0.0
    %1241 = vmatpush1.msra.mxu0 %v838
    %1242 = vmatprep.subr.mxu0 0.0
    %1243 = vmatpush1.msra.mxu0 %v839
    %1244 = vmatprep.subr.mxu0 0.0
    %1245 = vmatpush1.msra.mxu0 %v840
    %1246 = vmatprep.subr.mxu0 0.0
    %1247 = vmatpush1.msra.mxu0 %v841
    %1248 = vmatprep.subr.mxu0 0.0
    %1249 = vmatpush1.msra.mxu0 %v842
    %1250 = vmatprep.subr.mxu0 0.0
    %1251 = vmatpush1.msra.mxu0 %v843
    %1252 = vmatprep.subr.mxu0 0.0
    %1253 = vmatpush1.msra.mxu0 %v844
    %1254 = vmatprep.subr.mxu0 0.0
    %1255 = vmatpush1.msra.mxu0 %v845
    %1256 = vmatprep.subr.mxu0 0.0
    %1257 = vmatpush1.msra.mxu0 %v846
    %1258 = vmatprep.subr.mxu0 0.0
    %1259 = vmatpush1.msra.mxu0 %v847
    %1260 = vmatprep.subr.mxu0 0.0
    %1261 = vmatpush1.msra.mxu0 %v848
    %1262 = vmatprep.subr.mxu0 0.0
    %1263 = vmatpush1.msra.mxu0 %v849
    %1264 = vmatprep.subr.mxu0 0.0
    %1265 = vmatpush1.msra.mxu0 %v850
    %1266 = vmatprep.subr.mxu0 0.0
    %1267 = vmatpush1.msra.mxu0 %v851
    %1268 = vmatprep.mubr.f32.mxu0 %v781
    %1269 = vmatmul.mubr.f32.gmra.mrb[0].mxu0 %v780
    %v1270 = vpop.f32.mrb[0].mxu0
    %v1271 = vadd.f32 %v1183, %v1270
    %v1272 = vpop.f32.mrb[0].mxu0
    %1273 = vmatprep.mubr.f32.mxu0 %v789
    %1274 = vmatmul.mubr.f32.gmra.mrb[0].mxu0 %v788
    %v1275 = vpop.f32.mrb[0].mxu0
    %v1276 = vadd.f32 %v1186, %v1275
    %v1277 = vpop.f32.mrb[0].mxu0
    %1278 = vmatprep.mubr.f32.mxu0 %v797
    %1279 = vmatmul.mubr.f32.gmra.mrb[0].mxu0 %v796
    %v1280 = vpop.f32.mrb[0].mxu0
    %v1281 = vadd.f32 %v1191, %v1280
    %v1282 = vpop.f32.mrb[0].mxu0
    %1283 = vmatprep.mubr.f32.mxu0 %v805
    %1284 = vmatmul.mubr.f32.gmra.mrb[0].mxu0 %v804
    %v1285 = vpop.f32.mrb[0].mxu0
    %v1286 = vadd.f32 %v1194, %v1285
    %v1287 = vpop.f32.mrb[0].mxu0
    %1288 = vmatprep.mubr.f32.mxu0 %v813
    %1289 = vmatmul.mubr.f32.gmra.mrb[0].mxu0 %v812
    %v1290 = vpop.f32.mrb[0].mxu0
    %v1291 = vadd.f32 %v1199, %v1290
    %v1292 = vpop.f32.mrb[0].mxu0
    %1293 = vdwg.mxu0
    %1294 = vmatprep.subr.mxu0 0.0
    %1295 = vmatpush1.msra.mxu0 %v852
    %1296 = vmatprep.subr.mxu0 0.0
    %1297 = vmatpush1.msra.mxu0 %v853
    %1298 = vmatprep.subr.mxu0 0.0
    %1299 = vmatpush1.msra.mxu0 %v854
    %1300 = vmatprep.subr.mxu0 0.0
    %1301 = vmatpush1.msra.mxu0 %v855
    %1302 = vmatprep.subr.mxu0 0.0
    %1303 = vmatpush1.msra.mxu0 %v856
    %1304 = vmatprep.subr.mxu0 0.0
    %1305 = vmatpush1.msra.mxu0 %v857
    %1306 = vmatprep.subr.mxu0 0.0
    %1307 = vmatpush1.msra.mxu0 %v858
    %1308 = vmatprep.subr.mxu0 0.0
    %1309 = vmatpush1.msra.mxu0 %v859
    %1310 = vmatprep.subr.mxu0 0.0
    %1311 = vmatpush1.msra.mxu0 %v860
    %1312 = vmatprep.subr.mxu0 0.0
    %1313 = vmatpush1.msra.mxu0 %v861
    %1314 = vmatprep.subr.mxu0 0.0
    %1315 = vmatpush1.msra.mxu0 %v862
    %1316 = vmatprep.subr.mxu0 0.0
    %1317 = vmatpush1.msra.mxu0 %v863
    %1318 = vmatprep.subr.mxu0 0.0
    %1319 = vmatpush1.msra.mxu0 %v864
    %1320 = vmatprep.subr.mxu0 0.0
    %1321 = vmatpush1.msra.mxu0 %v865
    %1322 = vmatprep.subr.mxu0 0.0
    %1323 = vmatpush1.msra.mxu0 %v866
    %1324 = vmatprep.subr.mxu0 0.0
    %1325 = vmatpush1.msra.mxu0 %v867
    %1326 = vmatprep.subr.mxu0 0.0
    %1327 = vmatpush1.msra.mxu0 %v868
    %1328 = vmatprep.subr.mxu0 0.0
    %1329 = vmatpush1.msra.mxu0 %v869
    %1330 = vmatprep.subr.mxu0 0.0
    %1331 = vmatpush1.msra.mxu0 %v870
    %1332 = vmatprep.subr.mxu0 0.0
    %1333 = vmatpush1.msra.mxu0 %v871
    %1334 = vmatprep.subr.mxu0 0.0
    %1335 = vmatpush1.msra.mxu0 %v872
    %1336 = vmatprep.subr.mxu0 0.0
    %1337 = vmatpush1.msra.mxu0 %v873
    %1338 = vmatprep.subr.mxu0 0.0
    %1339 = vmatpush1.msra.mxu0 %v874
    %1340 = vmatprep.subr.mxu0 0.0
    %1341 = vmatpush1.msra.mxu0 %v875
    %1342 = vmatprep.subr.mxu0 0.0
    %1343 = vmatpush1.msra.mxu0 %v876
    %1344 = vmatprep.subr.mxu0 0.0
    %1345 = vmatpush1.msra.mxu0 %v877
    %1346 = vmatprep.subr.mxu0 0.0
    %1347 = vmatpush1.msra.mxu0 %v878
    %1348 = vmatprep.subr.mxu0 0.0
    %1349 = vmatpush1.msra.mxu0 %v879
    %1350 = vmatprep.subr.mxu0 0.0
    %1351 = vmatpush1.msra.mxu0 %v880
    %1352 = vmatprep.subr.mxu0 0.0
    %1353 = vmatpush1.msra.mxu0 %v881
    %1354 = vmatprep.subr.mxu0 0.0
    %1355 = vmatpush1.msra.mxu0 %v882
    %1356 = vmatprep.subr.mxu0 0.0
    %1357 = vmatpush1.msra.mxu0 %v883
    %1358 = vmatprep.mubr.f32.mxu0 %v783
    %1359 = vmatmul.mubr.f32.gmra.mrb[0].mxu0 %v782
    %v1360 = vpop.f32.mrb[0].mxu0
    %v1361 = vadd.f32 %v1271, %v1360
    %v1362 = vpop.f32.mrb[0].mxu0
    %1363 = vmatprep.mubr.f32.mxu0 %v791
    %1364 = vmatmul.mubr.f32.gmra.mrb[0].mxu0 %v790
    %v1365 = vpop.f32.mrb[0].mxu0
    %v1366 = vadd.f32 %v1276, %v1365
    %v1367 = vpop.f32.mrb[0].mxu0
    %1368 = vmatprep.mubr.f32.mxu0 %v799
    %1369 = vmatmul.mubr.f32.gmra.mrb[0].mxu0 %v798
    %v1370 = vpop.f32.mrb[0].mxu0
    %v1371 = vadd.f32 %v1281, %v1370
    %v1372 = vpop.f32.mrb[0].mxu0
    %1373 = vmatprep.mubr.f32.mxu0 %v807
    %1374 = vmatmul.mubr.f32.gmra.mrb[0].mxu0 %v806
    %v1375 = vpop.f32.mrb[0].mxu0
    %v1376 = vadd.f32 %v1286, %v1375
    %v1377 = vpop.f32.mrb[0].mxu0
    %1378 = vmatprep.mubr.f32.mxu0 %v815
    %1379 = vmatmul.mubr.f32.gmra.mrb[0].mxu0 %v814
    %v1380 = vpop.f32.mrb[0].mxu0
    %v1381 = vadd.f32 %v1291, %v1380
    %v1382 = vpop.f32.mrb[0].mxu0
    %1383 = vdwg.mxu0
    %1384 = vmatprep.subr.mxu0 0.0
    %1385 = vmatpush1.msra.mxu0 %v884
    %1386 = vmatprep.subr.mxu0 0.0
    %1387 = vmatpush1.msra.mxu0 %v885
    %1388 = vmatprep.subr.mxu0 0.0
    %1389 = vmatpush1.msra.mxu0 %v886
    %1390 = vmatprep.subr.mxu0 0.0
    %1391 = vmatpush1.msra.mxu0 %v887
    %1392 = vmatprep.subr.mxu0 0.0
    %1393 = vmatpush1.msra.mxu0 %v888
    %1394 = vmatprep.subr.mxu0 0.0
    %1395 = vmatpush1.msra.mxu0 %v889
    %1396 = vmatprep.subr.mxu0 0.0
    %1397 = vmatpush1.msra.mxu0 %v890
    %1398 = vmatprep.subr.mxu0 0.0
    %1399 = vmatpush1.msra.mxu0 %v891
    %1400 = vmatprep.subr.mxu0 0.0
    %1401 = vmatpush1.msra.mxu0 %v892
    %1402 = vmatprep.subr.mxu0 0.0
    %1403 = vmatpush1.msra.mxu0 %v893
    %1404 = vmatprep.subr.mxu0 0.0
    %1405 = vmatpush1.msra.mxu0 %v894
    %1406 = vmatprep.subr.mxu0 0.0
    %1407 = vmatpush1.msra.mxu0 %v895
    %1408 = vmatprep.subr.mxu0 0.0
    %1409 = vmatpush1.msra.mxu0 %v896
    %1410 = vmatprep.subr.mxu0 0.0
    %1411 = vmatpush1.msra.mxu0 %v897
    %1412 = vmatprep.subr.mxu0 0.0
    %1413 = vmatpush1.msra.mxu0 %v898
    %1414 = vmatprep.subr.mxu0 0.0
    %1415 = vmatpush1.msra.mxu0 %v899
    %1416 = vmatprep.subr.mxu0 0.0
    %1417 = vmatpush1.msra.mxu0 %v900
    %1418 = vmatprep.subr.mxu0 0.0
    %1419 = vmatpush1.msra.mxu0 %v901
    %1420 = vmatprep.subr.mxu0 0.0
    %1421 = vmatpush1.msra.mxu0 %v902
    %1422 = vmatprep.subr.mxu0 0.0
    %1423 = vmatpush1.msra.mxu0 %v903
    %1424 = vmatprep.subr.mxu0 0.0
    %1425 = vmatpush1.msra.mxu0 %v904
    %1426 = vmatprep.subr.mxu0 0.0
    %1427 = vmatpush1.msra.mxu0 %v905
    %1428 = vmatprep.subr.mxu0 0.0
    %1429 = vmatpush1.msra.mxu0 %v906
    %1430 = vmatprep.subr.mxu0 0.0
    %1431 = vmatpush1.msra.mxu0 %v907
    %1432 = vmatprep.subr.mxu0 0.0
    %1433 = vmatpush1.msra.mxu0 %v908
    %1434 = vmatprep.subr.mxu0 0.0
    %1435 = vmatpush1.msra.mxu0 %v909
    %1436 = vmatprep.subr.mxu0 0.0
    %1437 = vmatpush1.msra.mxu0 %v910
    %1438 = vmatprep.subr.mxu0 0.0
    %1439 = vmatpush1.msra.mxu0 %v911
    %1440 = vmatprep.subr.mxu0 0.0
    %1441 = vmatpush1.msra.mxu0 %v912
    %1442 = vmatprep.subr.mxu0 0.0
    %1443 = vmatpush1.msra.mxu0 %v913
    %1444 = vmatprep.subr.mxu0 0.0
    %1445 = vmatpush1.msra.mxu0 %v914
    %1446 = vmatprep.subr.mxu0 0.0
    %1447 = vmatpush1.msra.mxu0 %v915
    %1448 = vmatprep.mubr.f32.mxu0 %v785
    %1449 = vmatmul.mubr.f32.gmra.mrb[0].mxu0 %v784
    %v1450 = vpop.f32.mrb[0].mxu0
    %v1451 = vadd.f32 %v1361, %v1450
    %v1452 = vpop.f32.mrb[0].mxu0
    %1453 = vmatprep.mubr.f32.mxu0 %v793
    %1454 = vmatmul.mubr.f32.gmra.mrb[0].mxu0 %v792
    %v1455 = vpop.f32.mrb[0].mxu0
    %v1456 = vadd.f32 %v1366, %v1455
    %v1457 = vpop.f32.mrb[0].mxu0
    %1458 = vmatprep.mubr.f32.mxu0 %v801
    %1459 = vmatmul.mubr.f32.gmra.mrb[0].mxu0 %v800
    %v1460 = vpop.f32.mrb[0].mxu0
    %v1461 = vadd.f32 %v1371, %v1460
    %v1462 = vpop.f32.mrb[0].mxu0
    %1463 = vmatprep.mubr.f32.mxu0 %v809
    %1464 = vmatmul.mubr.f32.gmra.mrb[0].mxu0 %v808
    %v1465 = vpop.f32.mrb[0].mxu0
    %v1466 = vadd.f32 %v1376, %v1465
    %v1467 = vpop.f32.mrb[0].mxu0
    %1468 = vmatprep.mubr.f32.mxu0 %v817
    %1469 = vmatmul.mubr.f32.gmra.mrb[0].mxu0 %v816
    %v1470 = vpop.f32.mrb[0].mxu0
    %v1471 = vadd.f32 %v1381, %v1470
    %v1472 = vpop.f32.mrb[0].mxu0
    %1473 = vdwg.mxu0
    %1474 = vmatprep.subr.mxu0 0.0
    %1475 = vmatpush1.msra.mxu0 %v916
    %1476 = vmatprep.subr.mxu0 0.0
    %1477 = vmatpush1.msra.mxu0 %v917
    %1478 = vmatprep.subr.mxu0 0.0
    %1479 = vmatpush1.msra.mxu0 %v918
    %1480 = vmatprep.subr.mxu0 0.0
    %1481 = vmatpush1.msra.mxu0 %v919
    %1482 = vmatprep.subr.mxu0 0.0
    %1483 = vmatpush1.msra.mxu0 %v920
    %1484 = vmatprep.subr.mxu0 0.0
    %1485 = vmatpush1.msra.mxu0 %v921
    %1486 = vmatprep.subr.mxu0 0.0
    %1487 = vmatpush1.msra.mxu0 %v922
    %1488 = vmatprep.subr.mxu0 0.0
    %1489 = vmatpush1.msra.mxu0 %v923
    %1490 = vmatprep.subr.mxu0 0.0
    %1491 = vmatpush1.msra.mxu0 %v924
    %1492 = vmatprep.subr.mxu0 0.0
    %1493 = vmatpush1.msra.mxu0 %v925
    %1494 = vmatprep.subr.mxu0 0.0
    %1495 = vmatpush1.msra.mxu0 %v926
    %1496 = vmatprep.subr.mxu0 0.0
    %1497 = vmatpush1.msra.mxu0 %v927
    %1498 = vmatprep.subr.mxu0 0.0
    %1499 = vmatpush1.msra.mxu0 %v928
    %1500 = vmatprep.subr.mxu0 0.0
    %1501 = vmatpush1.msra.mxu0 %v929
    %1502 = vmatprep.subr.mxu0 0.0
    %1503 = vmatpush1.msra.mxu0 %v930
    %1504 = vmatprep.subr.mxu0 0.0
    %1505 = vmatpush1.msra.mxu0 %v931
    %1506 = vmatprep.subr.mxu0 0.0
    %1507 = vmatpush1.msra.mxu0 %v932
    %1508 = vmatprep.subr.mxu0 0.0
    %1509 = vmatpush1.msra.mxu0 %v933
    %1510 = vmatprep.subr.mxu0 0.0
    %1511 = vmatpush1.msra.mxu0 %v934
    %1512 = vmatprep.subr.mxu0 0.0
    %1513 = vmatpush1.msra.mxu0 %v935
    %1514 = vmatprep.subr.mxu0 0.0
    %1515 = vmatpush1.msra.mxu0 %v936
    %1516 = vmatprep.subr.mxu0 0.0
    %1517 = vmatpush1.msra.mxu0 %v937
    %1518 = vmatprep.subr.mxu0 0.0
    %1519 = vmatpush1.msra.mxu0 %v938
    %1520 = vmatprep.subr.mxu0 0.0
    %1521 = vmatpush1.msra.mxu0 %v939
    %1522 = vmatprep.subr.mxu0 0.0
    %1523 = vmatpush1.msra.mxu0 %v940
    %1524 = vmatprep.subr.mxu0 0.0
    %1525 = vmatpush1.msra.mxu0 %v941
    %1526 = vmatprep.subr.mxu0 0.0
    %1527 = vmatpush1.msra.mxu0 %v942
    %1528 = vmatprep.subr.mxu0 0.0
    %1529 = vmatpush1.msra.mxu0 %v943
    %1530 = vmatprep.subr.mxu0 0.0
    %1531 = vmatpush1.msra.mxu0 %v944
    %1532 = vmatprep.subr.mxu0 0.0
    %1533 = vmatpush1.msra.mxu0 %v945
    %1534 = vmatprep.subr.mxu0 0.0
    %1535 = vmatpush1.msra.mxu0 %v946
    %1536 = vmatprep.subr.mxu0 0.0
    %1537 = vmatpush1.msra.mxu0 %v947
    %1538 = vmatprep.mubr.f32.mxu0 %v787
    %1539 = vmatmul.mubr.f32.gmra.mrb[0].mxu0 %v786
    %v1540 = vpop.f32.mrb[0].mxu0
    %v1541 = vadd.f32 %v1451, %v1540
    %v1542 = vpop.f32.mrb[0].mxu0
    %1543 = vmatprep.mubr.f32.mxu0 %v795
    %1544 = vmatmul.mubr.f32.gmra.mrb[0].mxu0 %v794
    %v1545 = vpop.f32.mrb[0].mxu0
    %v1546 = vadd.f32 %v1456, %v1545
    %v1547 = vpop.f32.mrb[0].mxu0
    %1548 = vmatprep.mubr.f32.mxu0 %v803
    %1549 = vmatmul.mubr.f32.gmra.mrb[0].mxu0 %v802
    %v1550 = vpop.f32.mrb[0].mxu0
    %v1551 = vadd.f32 %v1461, %v1550
    %v1552 = vpop.f32.mrb[0].mxu0
    %1553 = vmatprep.mubr.f32.mxu0 %v811
    %1554 = vmatmul.mubr.f32.gmra.mrb[0].mxu0 %v810
    %v1555 = vpop.f32.mrb[0].mxu0
    %v1556 = vadd.f32 %v1466, %v1555
    %v1557 = vpop.f32.mrb[0].mxu0
    %1558 = vmatprep.mubr.f32.mxu0 %v819
    %1559 = vmatmul.mubr.f32.gmra.mrb[0].mxu0 %v818
    %v1560 = vpop.f32.mrb[0].mxu0
    %v1561 = vadd.f32 %v1471, %v1560
    %v1562 = vpop.f32.mrb[0].mxu0
    %1563 = vdwg.mxu0
    %v1564 = vld [vmem:[#allocation13] sm:$0x1]
    %v1566 = vlaneseq
    %v1567 = vshrl.u32 %v1566, 7
    %v1568 = vsub.s32 0, %v1567
    %v1569 = vrot.slane %v1564, %v1568
    %v1571 = vadd.f32 %v1541, %v1569
    %v1572 = vadd.f32 %v1546, %v1569
    %v1573 = vadd.f32 %v1551, %v1569
    %v1574 = vadd.f32 %v1556, %v1569
    %v1575 = vadd.f32 %v1561, %v1569
    %vm1576 = vcmask 64512
    %1577 = vst.msk [vmem:[#allocation14] sm:$0xff] %vm1576, %v1571
    %1578 = vst.msk [vmem:[#allocation14 + $0x8] sm:$0xff] %vm1576, %v1572
    %1579 = vst.msk [vmem:[#allocation14 + $0x10] sm:$0xff] %vm1576, %v1573
    %1580 = vst.msk [vmem:[#allocation14 + $0x18] sm:$0xff] %vm1576, %v1574
    %1581 = vst.msk [vmem:[#allocation14 + $0x20] sm:$0xff] %vm1576, %v1575
    // Predicated region
    $region58: #{deep_biaffine_forward.5} parent=1 // pred_check
      _
    $region59: #{deep_biaffine_forward.5} parent=1 // pred_check_branch
      %1583 = sbr.rel (0) target = $region61
    $region60: #{deep_biaffine_forward.5} parent=1 // pred_region
      %s1585 = ssub.s32 640, 640
      %1586 = vsyncadd [#allocation4], %s1585
      %s1587 = sshll.u32 [#allocation14], 4
      %s1588 = int_to_ptr.vmem [resolvable:$true] %s1587
      %1593 = dma.vmem_to_hbm [thread:$0]  %s1588, 640, %s7, [#allocation4], 128, 128, 8
    $region61: #{deep_biaffine_forward.5} parent=1 // pred_fallthru
      _
    // Predicated region
    $region62: #{deep_biaffine_forward.5} parent=1 // pred_check
      _
    $region63: #{deep_biaffine_forward.5} parent=1 // pred_check_branch
      %1595 = sbr.rel (0) target = $region65
    $region64: #{deep_biaffine_forward.5} parent=1 // pred_region
      %1596 = dma.done [#allocation4], 640
    $region65: #{deep_biaffine_forward.5} parent=1 // pred_fallthru
      _
    %1597 = vsyncpa [#allocation3], 1
    %1598 = vsyncpa [#allocation6], 1
    %1599 = vsyncpa [#allocation9], 1
    %1600 = vsyncpa [#allocation12], 1
    %1601 = vsyncpa [#allocation4], 1

</llo_original>
